<compile_context>
chip_gen: v6e
topology: v6e:2x2x1
jax: 0.10.0
libtpu: 0.0.40
codegen_flags: <defaults>
</compile_context>

<pallas_src>
import jax
import jax.numpy as jnp
from jax.experimental import pallas as pl
from jax.experimental.pallas import tpu as pltpu


# ---------------------------------------------------------------------------
# Fused kernel: one encoder layer + CLS classifier, per batch block.
# ---------------------------------------------------------------------------
def verifier_kernel(x_ref, mask_ref, wq_ref, wk_ref, wv_ref, wo_ref,
                    w1_ref, b1_ref, w2_ref, b2_ref, fcw_ref, fcb_ref,
                    out_ref):
    # x_ref:    [Bblk, S, H]  f32 embedded tokens for this batch block
    # mask_ref: [Bblk, 1, S]  f32 (1.0 = attend, 0.0 = masked key)
    # weights:  bf16 (wq/wk/wv/wo/w1/w2/fcw), biases f32 (b1/b2/fcb)
    # out_ref:  [Bblk, C_pad] f32 logits (lane-dense, padded classes)
    Bblk, S, H = x_ref.shape

    x = x_ref[...]                                 # f32 [Bblk, S, H]
    x2d = x.reshape(Bblk * S, H)                   # rows = Bblk*S -> fills MXU
    x_bf = x2d.astype(jnp.bfloat16)

    # ---- attention projections (bf16 MXU, f32 accumulate) ----
    q = jnp.dot(x_bf, wq_ref[...], preferred_element_type=jnp.float32)
    k = jnp.dot(x_bf, wk_ref[...], preferred_element_type=jnp.float32)
    v = jnp.dot(x_bf, wv_ref[...], preferred_element_type=jnp.float32)
    q3 = q.reshape(Bblk, S, H).astype(jnp.bfloat16)
    k3 = k.reshape(Bblk, S, H).astype(jnp.bfloat16)
    v3 = v.reshape(Bblk, S, H).astype(jnp.bfloat16)

    # ---- scores: contract on last dim directly (no explicit transpose) ----
    scores = jnp.einsum('bqd,bkd->bqk', q3, k3,
                        preferred_element_type=jnp.float32)
    scores = scores * (1.0 / jnp.sqrt(jnp.float32(H)))
    mask = mask_ref[...]                           # [Bblk, 1, S] -> bcast over q
    scores = scores + (1.0 - mask) * (-1e9)

    # ---- numerically stable softmax over keys (f32, EUP reciprocal) ----
    scores = scores - scores.max(axis=-1, keepdims=True)
    p = jnp.exp(scores)
    p = p * pl.reciprocal(p.sum(axis=-1, keepdims=True), approx=True)

    ctx = jnp.einsum('bqk,bkd->bqd', p.astype(jnp.bfloat16), v3,
                     preferred_element_type=jnp.float32)
    attn = jnp.dot(ctx.reshape(Bblk * S, H).astype(jnp.bfloat16), wo_ref[...],
                   preferred_element_type=jnp.float32)

    # ---- residual + layernorm (no affine, f32) ----
    h = x2d + attn
    mu = h.mean(axis=-1, keepdims=True)
    var = ((h - mu) ** 2).mean(axis=-1, keepdims=True)
    h = (h - mu) * jax.lax.rsqrt(var + 1e-5)

    # ---- feed-forward (bf16 MXU) ----
    f = jnp.dot(h.astype(jnp.bfloat16), w1_ref[...],
                preferred_element_type=jnp.float32) + b1_ref[...]
    f = jax.nn.gelu(f)
    f = jnp.dot(f.astype(jnp.bfloat16), w2_ref[...],
                preferred_element_type=jnp.float32) + b2_ref[...]

    h2 = h + f
    mu2 = h2.mean(axis=-1, keepdims=True)
    var2 = ((h2 - mu2) ** 2).mean(axis=-1, keepdims=True)
    h2 = (h2 - mu2) * jax.lax.rsqrt(var2 + 1e-5)

    # ---- fused classifier epilogue: CLS token (seq position 0) -> fc ----
    cls = h2.reshape(Bblk, S, H)[:, 0, :]          # [Bblk, H]
    logits = jnp.dot(cls.astype(jnp.bfloat16), fcw_ref[...],
                     preferred_element_type=jnp.float32) + fcb_ref[...]
    out_ref[...] = logits.astype(out_ref.dtype)


# ---------------------------------------------------------------------------
# Full SolutionVerifier forward (single pallas_call)
# ---------------------------------------------------------------------------
def solution_verifier_forward(input_ids, attention_mask, params, b_block=None):
    B, S = input_ids.shape
    H = params["tok_emb"].shape[1]
    FF = params["w1"].shape[1]
    C_pad = params["fc_w_t"].shape[1]
    C = params["num_classes"]

    # glue: embedding lookup (token + position) in plain JAX
    tok_emb = jnp.take(params["tok_emb"], input_ids, axis=0)        # [B, S, H]
    pos_emb = params["pos_emb"][None, :S, :]                        # [1, S, H]
    x = (tok_emb + pos_emb).astype(jnp.float32)
    mask_b1s = attention_mask.astype(jnp.float32)[:, None, :]       # [B, 1, S]

    # batch blocking: target >=256 GEMM rows per grid step
    if b_block is None:
        b_block = max(1, 256 // S)
    if b_block >= B:
        b_block = B                       # single step; block == full batch dim
    else:
        b_block = max(8, (b_block // 8) * 8)   # keep blocks sublane-friendly
    B_pad = pl.cdiv(B, b_block) * b_block
    if B_pad != B:
        x = jnp.pad(x, ((0, B_pad - B), (0, 0), (0, 0)))
        mask_b1s = jnp.pad(mask_b1s, ((0, B_pad - B), (0, 0), (0, 0)))

    full = lambda shape: pl.BlockSpec(shape, lambda b: (0,) * len(shape))

    logits_pad = pl.pallas_call(
        verifier_kernel,
        out_shape=jax.ShapeDtypeStruct((B_pad, C_pad), jnp.float32),
        grid=(B_pad // b_block,),
        in_specs=[
            pl.BlockSpec((b_block, S, H), lambda b: (b, 0, 0)),   # x
            pl.BlockSpec((b_block, 1, S), lambda b: (b, 0, 0)),   # mask
            full((H, H)),        # wq (bf16)
            full((H, H)),        # wk
            full((H, H)),        # wv
            full((H, H)),        # wo
            full((H, FF)),       # w1
            full((1, FF)),       # b1 (f32)
            full((FF, H)),       # w2
            full((1, H)),        # b2 (f32)
            full((H, C_pad)),    # fc weight (bf16, padded classes)
            full((1, C_pad)),    # fc bias   (f32, padded classes)
        ],
        out_specs=pl.BlockSpec((b_block, C_pad), lambda b: (b, 0)),
        compiler_params=pltpu.CompilerParams(
            dimension_semantics=("parallel",),
            vmem_limit_bytes=48 * 1024 * 1024,
        ),
    )(x, mask_b1s,
      params["wq"], params["wk"], params["wv"], params["wo"],
      params["w1"], params["b1"], params["w2"], params["b2"],
      params["fc_w_t"], params["fc_b"])

    return logits_pad[:B, :C]                                        # [B, C]


def init_params(key, vocab, max_seq, hidden, ffn, num_classes):
    ks = jax.random.split(key, 10)
    s = 0.02
    c_pad = max(128, ((num_classes + 127) // 128) * 128)   # lane-dense logits
    fc_w = s * jax.random.normal(ks[8], (hidden, num_classes), jnp.float32)
    fc_b = s * jax.random.normal(ks[9], (1, num_classes), jnp.float32)
    return {
        "tok_emb": s * jax.random.normal(ks[0], (vocab, hidden), jnp.float32),
        "pos_emb": s * jax.random.normal(ks[1], (max_seq, hidden), jnp.float32),
        # matmul weights stored bf16 (MXU-native, half the DMA / VMEM)
        "wq": (s * jax.random.normal(ks[2], (hidden, hidden))).astype(jnp.bfloat16),
        "wk": (s * jax.random.normal(ks[3], (hidden, hidden))).astype(jnp.bfloat16),
        "wv": (s * jax.random.normal(ks[4], (hidden, hidden))).astype(jnp.bfloat16),
        "wo": (s * jax.random.normal(ks[5], (hidden, hidden))).astype(jnp.bfloat16),
        "w1": (s * jax.random.normal(ks[6], (hidden, ffn))).astype(jnp.bfloat16),
        "b1": jnp.zeros((1, ffn), jnp.float32),
        "w2": (s * jax.random.normal(ks[7], (ffn, hidden))).astype(jnp.bfloat16),
        "b2": jnp.zeros((1, hidden), jnp.float32),
        # nn.Linear(hidden, num_classes): weight [C, H] stored transposed and
        # zero-padded to [H, C_pad] for a lane-dense output store.
        "fc_w_t": jnp.zeros((hidden, c_pad), jnp.float32)
                    .at[:, :num_classes].set(fc_w).astype(jnp.bfloat16),
        "fc_b": jnp.zeros((1, c_pad), jnp.float32).at[:, :num_classes].set(fc_b),
        "num_classes": num_classes,
    }


if __name__ == "__main__":
    # Small but TPU-aligned shapes: H, FF multiples of 128; S multiple of 8.
    B, S, H, FF, V, C = 2, 8, 128, 256, 64, 2

    key = jax.random.PRNGKey(0)
    k_ids, k_params = jax.random.split(key)

    input_ids = jax.random.randint(k_ids, (B, S), 0, V, dtype=jnp.int32)
    attention_mask = jnp.ones((B, S), dtype=jnp.int32)
    # make the second sequence partially padded (last 3 tokens masked)
    attention_mask = attention_mask.at[1, 5:].set(0)

    params = init_params(k_params, V, S, H, FF, C)

    logits = solution_verifier_forward(input_ids, attention_mask, params)
    logits = jax.block_until_ready(logits)

    assert logits.shape == (B, C) and logits.dtype == jnp.float32
    assert bool(jnp.all(jnp.isfinite(logits)))
    print("KERNEL_OK")
</pallas_src>

<mosaic_0001>
module attributes {stable_mosaic.version = 11 : i64} {
  func.func @verifier_kernel(%arg0: i32, %arg1: memref<2x8x128xf32, #tpu.memory_space<vmem>>, %arg2: memref<2x1x8xf32, #tpu.memory_space<vmem>>, %arg3: memref<128x128xbf16, #tpu.memory_space<vmem>>, %arg4: memref<128x128xbf16, #tpu.memory_space<vmem>>, %arg5: memref<128x128xbf16, #tpu.memory_space<vmem>>, %arg6: memref<128x128xbf16, #tpu.memory_space<vmem>>, %arg7: memref<128x256xbf16, #tpu.memory_space<vmem>>, %arg8: memref<1x256xf32, #tpu.memory_space<vmem>>, %arg9: memref<256x128xbf16, #tpu.memory_space<vmem>>, %arg10: memref<1x128xf32, #tpu.memory_space<vmem>>, %arg11: memref<128x128xbf16, #tpu.memory_space<vmem>>, %arg12: memref<1x128xf32, #tpu.memory_space<vmem>>, %arg13: memref<2x128xf32, #tpu.memory_space<vmem>>) attributes {dimension_semantics = [#tpu.dimension_semantics<parallel>], iteration_bounds = array<i64: 1>, scalar_prefetch = 0 : i64, scratch_operands = 0 : i64, tpu.core_type = #tpu.core_type<tc>, window_params = [{transform_indices = @transform_0, window_bounds = array<i64: 2, 8, 128>}, {transform_indices = @transform_1, window_bounds = array<i64: 2, 1, 8>}, {pipeline_mode = #tpu.pipeline_mode<synchronous>, transform_indices = @transform_2, window_bounds = array<i64: 128, 128>}, {pipeline_mode = #tpu.pipeline_mode<synchronous>, transform_indices = @transform_3, window_bounds = array<i64: 128, 128>}, {pipeline_mode = #tpu.pipeline_mode<synchronous>, transform_indices = @transform_4, window_bounds = array<i64: 128, 128>}, {pipeline_mode = #tpu.pipeline_mode<synchronous>, transform_indices = @transform_5, window_bounds = array<i64: 128, 128>}, {pipeline_mode = #tpu.pipeline_mode<synchronous>, transform_indices = @transform_6, window_bounds = array<i64: 128, 256>}, {pipeline_mode = #tpu.pipeline_mode<synchronous>, transform_indices = @transform_7, window_bounds = array<i64: 1, 256>}, {pipeline_mode = #tpu.pipeline_mode<synchronous>, transform_indices = @transform_8, window_bounds = array<i64: 256, 128>}, {pipeline_mode = #tpu.pipeline_mode<synchronous>, transform_indices = @transform_9, window_bounds = array<i64: 1, 128>}, {pipeline_mode = #tpu.pipeline_mode<synchronous>, transform_indices = @transform_10, window_bounds = array<i64: 128, 128>}, {pipeline_mode = #tpu.pipeline_mode<synchronous>, transform_indices = @transform_11, window_bounds = array<i64: 1, 128>}, {transform_indices = @transform_12, window_bounds = array<i64: 2, 128>}]} {
    %c0 = arith.constant 0 : index
    %c0_0 = arith.constant 0 : index
    %c0_1 = arith.constant 0 : index
    %0 = vector.load %arg1[%c0, %c0_0, %c0_1] : memref<2x8x128xf32, #tpu.memory_space<vmem>>, vector<2x8x128xf32>
    %1 = vector.shape_cast %0 : vector<2x8x128xf32> to vector<16x128xf32>
    %2 = arith.truncf %1 : vector<16x128xf32> to vector<16x128xbf16>
    %c0_2 = arith.constant 0 : index
    %c0_3 = arith.constant 0 : index
    %3 = vector.load %arg3[%c0_2, %c0_3] : memref<128x128xbf16, #tpu.memory_space<vmem>>, vector<128x128xbf16>
    %cst = arith.constant dense<0.000000e+00> : vector<16x128xf32>
    %4 = tpu.matmul %2, %3, %cst {dimension_numbers = #tpu.dot_dimension_numbers<[1], [0], [0], [1], [0, 0, 1, 1], [], []>} : vector<16x128xbf16>, vector<128x128xbf16>, vector<16x128xf32> -> vector<16x128xf32>
    %c0_4 = arith.constant 0 : index
    %c0_5 = arith.constant 0 : index
    %5 = vector.load %arg4[%c0_4, %c0_5] : memref<128x128xbf16, #tpu.memory_space<vmem>>, vector<128x128xbf16>
    %cst_6 = arith.constant dense<0.000000e+00> : vector<16x128xf32>
    %6 = tpu.matmul %2, %5, %cst_6 {dimension_numbers = #tpu.dot_dimension_numbers<[1], [0], [0], [1], [0, 0, 1, 1], [], []>} : vector<16x128xbf16>, vector<128x128xbf16>, vector<16x128xf32> -> vector<16x128xf32>
    %c0_7 = arith.constant 0 : index
    %c0_8 = arith.constant 0 : index
    %7 = vector.load %arg5[%c0_7, %c0_8] : memref<128x128xbf16, #tpu.memory_space<vmem>>, vector<128x128xbf16>
    %cst_9 = arith.constant dense<0.000000e+00> : vector<16x128xf32>
    %8 = tpu.matmul %2, %7, %cst_9 {dimension_numbers = #tpu.dot_dimension_numbers<[1], [0], [0], [1], [0, 0, 1, 1], [], []>} : vector<16x128xbf16>, vector<128x128xbf16>, vector<16x128xf32> -> vector<16x128xf32>
    %9 = vector.shape_cast %4 : vector<16x128xf32> to vector<2x8x128xf32>
    %10 = arith.truncf %9 : vector<2x8x128xf32> to vector<2x8x128xbf16>
    %11 = vector.shape_cast %6 : vector<16x128xf32> to vector<2x8x128xf32>
    %12 = arith.truncf %11 : vector<2x8x128xf32> to vector<2x8x128xbf16>
    %13 = vector.shape_cast %8 : vector<16x128xf32> to vector<2x8x128xf32>
    %14 = arith.truncf %13 : vector<2x8x128xf32> to vector<2x8x128xbf16>
    "tpu.trace_start"() <{level = 10 : i32, message = "bqd,bkd->bqk"}> : () -> ()
    %cst_10 = arith.constant dense<0.000000e+00> : vector<2x8x8xf32>
    %15 = tpu.matmul %10, %12, %cst_10 {dimension_numbers = #tpu.dot_dimension_numbers<[2], [2], [1], [1], [0, 0, 0, 1, 1, 1], [0], [0]>} : vector<2x8x128xbf16>, vector<2x8x128xbf16>, vector<2x8x8xf32> -> vector<2x8x8xf32>
    %cst_11 = arith.constant 1.280000e+02 : f32
    "tpu.trace_stop"() : () -> ()
    %16 = math.sqrt %cst_11 : f32
    %cst_12 = arith.constant 1.000000e+00 : f32
    %17 = arith.divf %cst_12, %16 : f32
    %18 = vector.broadcast %17 : f32 to vector<2x8x8xf32>
    %19 = arith.mulf %15, %18 : vector<2x8x8xf32>
    %c0_13 = arith.constant 0 : index
    %c0_14 = arith.constant 0 : index
    %c0_15 = arith.constant 0 : index
    %20 = vector.load %arg2[%c0_13, %c0_14, %c0_15] : memref<2x1x8xf32, #tpu.memory_space<vmem>>, vector<2x1x8xf32>
    %cst_16 = arith.constant 1.000000e+00 : f32
    %21 = vector.broadcast %cst_16 : f32 to vector<2x1x8xf32>
    %22 = arith.subf %21, %20 : vector<2x1x8xf32>
    %cst_17 = arith.constant -1.000000e+09 : f32
    %23 = vector.broadcast %cst_17 : f32 to vector<2x1x8xf32>
    %24 = arith.mulf %22, %23 : vector<2x1x8xf32>
    %25 = vector.broadcast %24 : vector<2x1x8xf32> to vector<2x8x8xf32>
    %26 = arith.addf %19, %25 : vector<2x8x8xf32>
    %cst_18 = arith.constant dense<0xFF800000> : vector<2x8xf32>
    %27 = vector.multi_reduction <maximumf>, %26, %cst_18 [2] : vector<2x8x8xf32> to vector<2x8xf32>
    %28 = vector.shape_cast %27 : vector<2x8xf32> to vector<2x8x1xf32>
    %29 = vector.broadcast %28 : vector<2x8x1xf32> to vector<2x8x8xf32>
    %30 = arith.subf %26, %29 : vector<2x8x8xf32>
    %31 = math.exp %30 : vector<2x8x8xf32>
    %cst_19 = arith.constant dense<0.000000e+00> : vector<2x8xf32>
    %32 = vector.multi_reduction <add>, %31, %cst_19 [2] : vector<2x8x8xf32> to vector<2x8xf32>
    %33 = vector.shape_cast %32 : vector<2x8xf32> to vector<2x8x1xf32>
    %34 = tpu.reciprocal %33 {approx = true} : vector<2x8x1xf32> -> vector<2x8x1xf32>
    %35 = vector.broadcast %34 : vector<2x8x1xf32> to vector<2x8x8xf32>
    %36 = arith.mulf %31, %35 : vector<2x8x8xf32>
    %37 = arith.truncf %36 : vector<2x8x8xf32> to vector<2x8x8xbf16>
    "tpu.trace_start"() <{level = 10 : i32, message = "bqk,bkd->bqd"}> : () -> ()
    %cst_20 = arith.constant dense<0.000000e+00> : vector<2x8x128xf32>
    %38 = tpu.matmul %37, %14, %cst_20 {dimension_numbers = #tpu.dot_dimension_numbers<[2], [1], [1], [2], [0, 0, 0, 1, 1, 2], [0], [0]>} : vector<2x8x8xbf16>, vector<2x8x128xbf16>, vector<2x8x128xf32> -> vector<2x8x128xf32>
    "tpu.trace_stop"() : () -> ()
    %39 = vector.shape_cast %38 : vector<2x8x128xf32> to vector<16x128xf32>
    %40 = arith.truncf %39 : vector<16x128xf32> to vector<16x128xbf16>
    %c0_21 = arith.constant 0 : index
    %c0_22 = arith.constant 0 : index
    %41 = vector.load %arg6[%c0_21, %c0_22] : memref<128x128xbf16, #tpu.memory_space<vmem>>, vector<128x128xbf16>
    %cst_23 = arith.constant dense<0.000000e+00> : vector<16x128xf32>
    %42 = tpu.matmul %40, %41, %cst_23 {dimension_numbers = #tpu.dot_dimension_numbers<[1], [0], [0], [1], [0, 0, 1, 1], [], []>} : vector<16x128xbf16>, vector<128x128xbf16>, vector<16x128xf32> -> vector<16x128xf32>
    %43 = arith.addf %1, %42 : vector<16x128xf32>
    %cst_24 = arith.constant dense<0.000000e+00> : vector<16xf32>
    %44 = vector.multi_reduction <add>, %43, %cst_24 [1] : vector<16x128xf32> to vector<16xf32>
    %45 = vector.shape_cast %44 : vector<16xf32> to vector<16x1xf32>
    %cst_25 = arith.constant 1.280000e+02 : f32
    %46 = vector.broadcast %cst_25 : f32 to vector<16x1xf32>
    %47 = arith.divf %45, %46 : vector<16x1xf32>
    %48 = vector.broadcast %47 : vector<16x1xf32> to vector<16x128xf32>
    %49 = arith.subf %43, %48 : vector<16x128xf32>
    %50 = arith.mulf %49, %49 : vector<16x128xf32>
    %cst_26 = arith.constant dense<0.000000e+00> : vector<16xf32>
    %51 = vector.multi_reduction <add>, %50, %cst_26 [1] : vector<16x128xf32> to vector<16xf32>
    %52 = vector.shape_cast %51 : vector<16xf32> to vector<16x1xf32>
    %cst_27 = arith.constant 1.280000e+02 : f32
    %53 = vector.broadcast %cst_27 : f32 to vector<16x1xf32>
    %54 = arith.divf %52, %53 : vector<16x1xf32>
    %55 = vector.broadcast %47 : vector<16x1xf32> to vector<16x128xf32>
    %56 = arith.subf %43, %55 : vector<16x128xf32>
    %cst_28 = arith.constant 9.99999974E-6 : f32
    %57 = vector.broadcast %cst_28 : f32 to vector<16x1xf32>
    %58 = arith.addf %54, %57 : vector<16x1xf32>
    %59 = math.rsqrt %58 : vector<16x1xf32>
    %60 = vector.broadcast %59 : vector<16x1xf32> to vector<16x128xf32>
    %61 = arith.mulf %56, %60 : vector<16x128xf32>
    %62 = arith.truncf %61 : vector<16x128xf32> to vector<16x128xbf16>
    %c0_29 = arith.constant 0 : index
    %c0_30 = arith.constant 0 : index
    %63 = vector.load %arg7[%c0_29, %c0_30] : memref<128x256xbf16, #tpu.memory_space<vmem>>, vector<128x256xbf16>
    %cst_31 = arith.constant dense<0.000000e+00> : vector<16x256xf32>
    %64 = tpu.matmul %62, %63, %cst_31 {dimension_numbers = #tpu.dot_dimension_numbers<[1], [0], [0], [1], [0, 0, 1, 1], [], []>} : vector<16x128xbf16>, vector<128x256xbf16>, vector<16x256xf32> -> vector<16x256xf32>
    %c0_32 = arith.constant 0 : index
    %c0_33 = arith.constant 0 : index
    %65 = vector.load %arg8[%c0_32, %c0_33] : memref<1x256xf32, #tpu.memory_space<vmem>>, vector<1x256xf32>
    %66 = vector.broadcast %65 : vector<1x256xf32> to vector<16x256xf32>
    %67 = arith.addf %64, %66 : vector<16x256xf32>
    %68 = arith.mulf %67, %67 : vector<16x256xf32>
    %69 = arith.mulf %67, %68 : vector<16x256xf32>
    %cst_34 = arith.constant 4.471500e-02 : f32
    %70 = vector.broadcast %cst_34 : f32 to vector<16x256xf32>
    %71 = arith.mulf %70, %69 : vector<16x256xf32>
    %72 = arith.addf %67, %71 : vector<16x256xf32>
    %cst_35 = arith.constant 0.797884583 : f32
    %73 = vector.broadcast %cst_35 : f32 to vector<16x256xf32>
    %74 = arith.mulf %73, %72 : vector<16x256xf32>
    %75 = math.tanh %74 : vector<16x256xf32>
    %cst_36 = arith.constant 1.000000e+00 : f32
    %76 = vector.broadcast %cst_36 : f32 to vector<16x256xf32>
    %77 = arith.addf %76, %75 : vector<16x256xf32>
    %cst_37 = arith.constant 5.000000e-01 : f32
    %78 = vector.broadcast %cst_37 : f32 to vector<16x256xf32>
    %79 = arith.mulf %78, %77 : vector<16x256xf32>
    %80 = arith.mulf %67, %79 : vector<16x256xf32>
    %81 = arith.truncf %80 : vector<16x256xf32> to vector<16x256xbf16>
    %c0_38 = arith.constant 0 : index
    %c0_39 = arith.constant 0 : index
    %82 = vector.load %arg9[%c0_38, %c0_39] : memref<256x128xbf16, #tpu.memory_space<vmem>>, vector<256x128xbf16>
    %cst_40 = arith.constant dense<0.000000e+00> : vector<16x128xf32>
    %83 = tpu.matmul %81, %82, %cst_40 {dimension_numbers = #tpu.dot_dimension_numbers<[1], [0], [0], [1], [0, 0, 1, 1], [], []>} : vector<16x256xbf16>, vector<256x128xbf16>, vector<16x128xf32> -> vector<16x128xf32>
    %c0_41 = arith.constant 0 : index
    %c0_42 = arith.constant 0 : index
    %84 = vector.load %arg10[%c0_41, %c0_42] : memref<1x128xf32, #tpu.memory_space<vmem>>, vector<1x128xf32>
    %85 = vector.broadcast %84 : vector<1x128xf32> to vector<16x128xf32>
    %86 = arith.addf %83, %85 : vector<16x128xf32>
    %87 = arith.addf %61, %86 : vector<16x128xf32>
    %cst_43 = arith.constant dense<0.000000e+00> : vector<16xf32>
    %88 = vector.multi_reduction <add>, %87, %cst_43 [1] : vector<16x128xf32> to vector<16xf32>
    %89 = vector.shape_cast %88 : vector<16xf32> to vector<16x1xf32>
    %cst_44 = arith.constant 1.280000e+02 : f32
    %90 = vector.broadcast %cst_44 : f32 to vector<16x1xf32>
    %91 = arith.divf %89, %90 : vector<16x1xf32>
    %92 = vector.broadcast %91 : vector<16x1xf32> to vector<16x128xf32>
    %93 = arith.subf %87, %92 : vector<16x128xf32>
    %94 = arith.mulf %93, %93 : vector<16x128xf32>
    %cst_45 = arith.constant dense<0.000000e+00> : vector<16xf32>
    %95 = vector.multi_reduction <add>, %94, %cst_45 [1] : vector<16x128xf32> to vector<16xf32>
    %96 = vector.shape_cast %95 : vector<16xf32> to vector<16x1xf32>
    %cst_46 = arith.constant 1.280000e+02 : f32
    %97 = vector.broadcast %cst_46 : f32 to vector<16x1xf32>
    %98 = arith.divf %96, %97 : vector<16x1xf32>
    %99 = vector.broadcast %91 : vector<16x1xf32> to vector<16x128xf32>
    %100 = arith.subf %87, %99 : vector<16x128xf32>
    %cst_47 = arith.constant 9.99999974E-6 : f32
    %101 = vector.broadcast %cst_47 : f32 to vector<16x1xf32>
    %102 = arith.addf %98, %101 : vector<16x1xf32>
    %103 = math.rsqrt %102 : vector<16x1xf32>
    %104 = vector.broadcast %103 : vector<16x1xf32> to vector<16x128xf32>
    %105 = arith.mulf %100, %104 : vector<16x128xf32>
    %106 = vector.shape_cast %105 : vector<16x128xf32> to vector<2x8x128xf32>
    %107 = vector.extract_strided_slice %106 {offsets = [0, 0, 0], sizes = [2, 1, 128], strides = [1, 1, 1]} : vector<2x8x128xf32> to vector<2x1x128xf32>
    %108 = vector.shape_cast %107 : vector<2x1x128xf32> to vector<2x128xf32>
    %109 = arith.truncf %108 : vector<2x128xf32> to vector<2x128xbf16>
    %c0_48 = arith.constant 0 : index
    %c0_49 = arith.constant 0 : index
    %110 = vector.load %arg11[%c0_48, %c0_49] : memref<128x128xbf16, #tpu.memory_space<vmem>>, vector<128x128xbf16>
    %cst_50 = arith.constant dense<0.000000e+00> : vector<2x128xf32>
    %111 = tpu.matmul %109, %110, %cst_50 {dimension_numbers = #tpu.dot_dimension_numbers<[1], [0], [0], [1], [0, 0, 1, 1], [], []>} : vector<2x128xbf16>, vector<128x128xbf16>, vector<2x128xf32> -> vector<2x128xf32>
    %c0_51 = arith.constant 0 : index
    %c0_52 = arith.constant 0 : index
    %112 = vector.load %arg12[%c0_51, %c0_52] : memref<1x128xf32, #tpu.memory_space<vmem>>, vector<1x128xf32>
    %113 = vector.broadcast %112 : vector<1x128xf32> to vector<2x128xf32>
    %114 = arith.addf %111, %113 : vector<2x128xf32>
    %c0_53 = arith.constant 0 : index
    %c0_54 = arith.constant 0 : index
    %115 = vector.load %arg13[%c0_53, %c0_54] : memref<2x128xf32, #tpu.memory_space<vmem>>, vector<2x128xf32>
    tpu.vector_store %arg13[%c0_53, %c0_54], %114 {strides = array<i32>} : memref<2x128xf32, #tpu.memory_space<vmem>>, vector<2x128xf32>,
    return
  }
  func.func @transform_0(%arg0: i32) -> (i32, i32, i32) {
    %c0_i32 = arith.constant 0 : i32
    %c0_i32_0 = arith.constant 0 : i32
    %c0_i32_1 = arith.constant 0 : i32
    return %arg0, %c0_i32, %c0_i32_0 : i32, i32, i32
  }
  func.func @transform_1(%arg0: i32) -> (i32, i32, i32) {
    %c0_i32 = arith.constant 0 : i32
    %c0_i32_0 = arith.constant 0 : i32
    %c0_i32_1 = arith.constant 0 : i32
    return %arg0, %c0_i32, %c0_i32_0 : i32, i32, i32
  }
  func.func @transform_2(%arg0: i32) -> (i32, i32) {
    %c0_i32 = arith.constant 0 : i32
    %c0_i32_0 = arith.constant 0 : i32
    %c0_i32_1 = arith.constant 0 : i32
    return %c0_i32, %c0_i32_0 : i32, i32
  }
  func.func @transform_3(%arg0: i32) -> (i32, i32) {
    %c0_i32 = arith.constant 0 : i32
    %c0_i32_0 = arith.constant 0 : i32
    %c0_i32_1 = arith.constant 0 : i32
    return %c0_i32, %c0_i32_0 : i32, i32
  }
  func.func @transform_4(%arg0: i32) -> (i32, i32) {
    %c0_i32 = arith.constant 0 : i32
    %c0_i32_0 = arith.constant 0 : i32
    %c0_i32_1 = arith.constant 0 : i32
    return %c0_i32, %c0_i32_0 : i32, i32
  }
  func.func @transform_5(%arg0: i32) -> (i32, i32) {
    %c0_i32 = arith.constant 0 : i32
    %c0_i32_0 = arith.constant 0 : i32
    %c0_i32_1 = arith.constant 0 : i32
    return %c0_i32, %c0_i32_0 : i32, i32
  }
  func.func @transform_6(%arg0: i32) -> (i32, i32) {
    %c0_i32 = arith.constant 0 : i32
    %c0_i32_0 = arith.constant 0 : i32
    %c0_i32_1 = arith.constant 0 : i32
    return %c0_i32, %c0_i32_0 : i32, i32
  }
  func.func @transform_7(%arg0: i32) -> (i32, i32) {
    %c0_i32 = arith.constant 0 : i32
    %c0_i32_0 = arith.constant 0 : i32
    %c0_i32_1 = arith.constant 0 : i32
    return %c0_i32, %c0_i32_0 : i32, i32
  }
  func.func @transform_8(%arg0: i32) -> (i32, i32) {
    %c0_i32 = arith.constant 0 : i32
    %c0_i32_0 = arith.constant 0 : i32
    %c0_i32_1 = arith.constant 0 : i32
    return %c0_i32, %c0_i32_0 : i32, i32
  }
  func.func @transform_9(%arg0: i32) -> (i32, i32) {
    %c0_i32 = arith.constant 0 : i32
    %c0_i32_0 = arith.constant 0 : i32
    %c0_i32_1 = arith.constant 0 : i32
    return %c0_i32, %c0_i32_0 : i32, i32
  }
  func.func @transform_10(%arg0: i32) -> (i32, i32) {
    %c0_i32 = arith.constant 0 : i32
    %c0_i32_0 = arith.constant 0 : i32
    %c0_i32_1 = arith.constant 0 : i32
    return %c0_i32, %c0_i32_0 : i32, i32
  }
  func.func @transform_11(%arg0: i32) -> (i32, i32) {
    %c0_i32 = arith.constant 0 : i32
    %c0_i32_0 = arith.constant 0 : i32
    %c0_i32_1 = arith.constant 0 : i32
    return %c0_i32, %c0_i32_0 : i32, i32
  }
  func.func @transform_12(%arg0: i32) -> (i32, i32) {
    %c0_i32 = arith.constant 0 : i32
    %c0_i32_0 = arith.constant 0 : i32
    return %arg0, %c0_i32 : i32, i32
  }
}

</mosaic_0001>

<llo_original>
// kernel: tpu_custom_call.1
$region0: #{tpu_custom_call.1}
  #allocation0 [shape = 'u32[]', space=smem, size = 0x4, offset = 0x4, fixed_abs, tag = 'smem constant byte address 0x4 - core index']
  #allocation1 [shape = 'u32[144,128]{1,0:T(1,128)}', space=vmem, size = 0x12000, scoped, tag = 'internal scratch']
  %s0 = inlined_call_operand.hbm [shape: f32[2,8,128], index: 0, kind: input, shape index: {}]
  %s1 = inlined_call_operand.hbm [shape: f32[2,1,8], index: 1, kind: input, shape index: {}]
  %s2 = inlined_call_operand.hbm [shape: bf16[128,128], index: 2, kind: input, shape index: {}]
  %s3 = inlined_call_operand.hbm [shape: bf16[128,128], index: 3, kind: input, shape index: {}]
  %s4 = inlined_call_operand.hbm [shape: bf16[128,128], index: 4, kind: input, shape index: {}]
  %s5 = inlined_call_operand.hbm [shape: bf16[128,128], index: 5, kind: input, shape index: {}]
  %s6 = inlined_call_operand.hbm [shape: bf16[128,256], index: 6, kind: input, shape index: {}]
  %s7 = inlined_call_operand.vmem [shape: f32[1,256], index: 7, kind: input, shape index: {}]
  %s8 = inlined_call_operand.hbm [shape: bf16[256,128], index: 8, kind: input, shape index: {}]
  %s9 = inlined_call_operand.vmem [shape: f32[1,128], index: 9, kind: input, shape index: {}]
  %s10 = inlined_call_operand.hbm [shape: bf16[128,128], index: 10, kind: input, shape index: {}]
  %s11 = inlined_call_operand.vmem [shape: f32[1,128], index: 11, kind: input, shape index: {}]
  %s12 = inlined_call_operand.hbm [shape: f32[2,128], index: 12, kind: output, shape index: {}]
  %s13 = sld [smem:[#allocation0]]
  $region94: #{tpu_custom_call.1} parent=0
    _
  %s15 = ssub.s32 1, %s13
  %s16 = scalar_select 0, %s15, %s13
  $region1: #{tpu_custom_call.1} parent=0
    #allocation2 [shape = 'u8[8192]{0}', space=vmem, size = 0x2000, scoped, tag = 'input window, operand 0, single buffered']
    #allocation3 [shape = 's32[1]{0}', space=sflag, size = 0x4, scoped, tag = 'scoped memory for tpu_custom_call.1']
    #allocation4 [shape = 's32[1]{0}', space=sflag, size = 0x4, scoped, tag = 'scoped memory for tpu_custom_call.1']
    #allocation5 [shape = 'u8[1024]{0}', space=vmem, size = 0x400, scoped, tag = 'input window, operand 1, single buffered']
    #allocation6 [shape = 's32[1]{0}', space=sflag, size = 0x4, scoped, tag = 'scoped memory for tpu_custom_call.1']
    #allocation7 [shape = 'u8[32768]{0}', space=vmem, size = 0x8000, scoped, tag = 'input window, operand 2, single buffered']
    #allocation8 [shape = 'u8[32768]{0}', space=vmem, size = 0x8000, scoped, tag = 'input window, operand 3, single buffered']
    #allocation9 [shape = 's32[1]{0}', space=sflag, size = 0x4, scoped, tag = 'scoped memory for tpu_custom_call.1']
    #allocation10 [shape = 'u8[32768]{0}', space=vmem, size = 0x8000, scoped, tag = 'input window, operand 4, single buffered']
    #allocation11 [shape = 'u8[32768]{0}', space=vmem, size = 0x8000, scoped, tag = 'input window, operand 5, single buffered']
    #allocation12 [shape = 's32[1]{0}', space=sflag, size = 0x4, scoped, tag = 'scoped memory for tpu_custom_call.1']
    #allocation13 [shape = 'u8[65536]{0}', space=vmem, size = 0x10000, scoped, tag = 'input window, operand 6, single buffered']
    #allocation14 [shape = 'u8[65536]{0}', space=vmem, size = 0x10000, scoped, tag = 'input window, operand 8, single buffered']
    #allocation15 [shape = 's32[1]{0}', space=sflag, size = 0x4, scoped, tag = 'scoped memory for tpu_custom_call.1']
    #allocation16 [shape = 'u8[32768]{0}', space=vmem, size = 0x8000, scoped, tag = 'input window, operand 10, single buffered']
    #allocation17 [shape = 'u8[1024]{0}', space=vmem, size = 0x400, scoped, tag = 'output window, operand 0, single buffered']
    %17 = vsyncpa [#allocation3], 0
    %18 = vsyncpa [#allocation6], 0
    %19 = vsyncpa [#allocation9], 0
    %20 = vsyncpa [#allocation12], 0
    %21 = vsyncpa [#allocation15], 0
    %22 = vsyncpa [#allocation4], 0
    // Predicated region
    $region2: #{tpu_custom_call.1} parent=1 // pred_check
      _
    $region3: #{tpu_custom_call.1} parent=1 // pred_check_branch
      %24 = sbr.rel (0) target = $region5
    $region4: #{tpu_custom_call.1} parent=1 // pred_region
      %s26 = ssub.s32 256, 256
      %27 = vsyncadd [#allocation3], %s26
      %s28 = sshll.u32 [#allocation2], 4
      %s29 = int_to_ptr.vmem [resolvable:$true] %s28
      %34 = dma.hbm_to_vmem [thread:$0]  %s0, 256, %s29, [#allocation3], 128, 128, 8
    $region5: #{tpu_custom_call.1} parent=1 // pred_fallthru
      _
    // Predicated region
    $region6: #{tpu_custom_call.1} parent=1 // pred_check
      _
    $region7: #{tpu_custom_call.1} parent=1 // pred_check_branch
      %36 = sbr.rel (0) target = $region9
    $region8: #{tpu_custom_call.1} parent=1 // pred_region
      %s38 = ssub.s32 32, 32
      %39 = vsyncadd [#allocation6], %s38
      %s40 = sshll.u32 [#allocation5], 4
      %s41 = int_to_ptr.vmem [resolvable:$true] %s40
      %46 = dma.hbm_to_vmem [thread:$0]  %s1, 32, %s41, [#allocation6], 16, 16, 1
    $region9: #{tpu_custom_call.1} parent=1 // pred_fallthru
      _
    // Predicated region
    $region10: #{tpu_custom_call.1} parent=1 // pred_check
      _
    $region11: #{tpu_custom_call.1} parent=1 // pred_check_branch
      %48 = sbr.rel (0) target = $region13
    $region12: #{tpu_custom_call.1} parent=1 // pred_region
      %s50 = ssub.s32 1024, 1024
      %51 = vsyncadd [#allocation6], %s50
      %s52 = sshll.u32 [#allocation7], 4
      %s53 = int_to_ptr.vmem [resolvable:$true] %s52
      %58 = dma.hbm_to_vmem [thread:$0]  %s2, 1024, %s53, [#allocation6], 64, 64, 4
    $region13: #{tpu_custom_call.1} parent=1 // pred_fallthru
      _
    // Predicated region
    $region14: #{tpu_custom_call.1} parent=1 // pred_check
      _
    $region15: #{tpu_custom_call.1} parent=1 // pred_check_branch
      %60 = sbr.rel (0) target = $region17
    $region16: #{tpu_custom_call.1} parent=1 // pred_region
      %s62 = ssub.s32 1024, 1024
      %63 = vsyncadd [#allocation9], %s62
      %s64 = sshll.u32 [#allocation8], 4
      %s65 = int_to_ptr.vmem [resolvable:$true] %s64
      %70 = dma.hbm_to_vmem [thread:$0]  %s3, 1024, %s65, [#allocation9], 64, 64, 4
    $region17: #{tpu_custom_call.1} parent=1 // pred_fallthru
      _
    // Predicated region
    $region18: #{tpu_custom_call.1} parent=1 // pred_check
      _
    $region19: #{tpu_custom_call.1} parent=1 // pred_check_branch
      %72 = sbr.rel (0) target = $region21
    $region20: #{tpu_custom_call.1} parent=1 // pred_region
      %s74 = ssub.s32 1024, 1024
      %75 = vsyncadd [#allocation9], %s74
      %s76 = sshll.u32 [#allocation10], 4
      %s77 = int_to_ptr.vmem [resolvable:$true] %s76
      %82 = dma.hbm_to_vmem [thread:$0]  %s4, 1024, %s77, [#allocation9], 64, 64, 4
    $region21: #{tpu_custom_call.1} parent=1 // pred_fallthru
      _
    // Predicated region
    $region22: #{tpu_custom_call.1} parent=1 // pred_check
      _
    $region23: #{tpu_custom_call.1} parent=1 // pred_check_branch
      %84 = sbr.rel (0) target = $region25
    $region24: #{tpu_custom_call.1} parent=1 // pred_region
      %s86 = ssub.s32 1024, 1024
      %87 = vsyncadd [#allocation12], %s86
      %s88 = sshll.u32 [#allocation11], 4
      %s89 = int_to_ptr.vmem [resolvable:$true] %s88
      %94 = dma.hbm_to_vmem [thread:$0]  %s5, 1024, %s89, [#allocation12], 64, 64, 4
    $region25: #{tpu_custom_call.1} parent=1 // pred_fallthru
      _
    // Predicated region
    $region26: #{tpu_custom_call.1} parent=1 // pred_check
      _
    $region27: #{tpu_custom_call.1} parent=1 // pred_check_branch
      %96 = sbr.rel (0) target = $region29
    $region28: #{tpu_custom_call.1} parent=1 // pred_region
      %s98 = ssub.s32 2048, 2048
      %99 = vsyncadd [#allocation12], %s98
      %s100 = sshll.u32 [#allocation13], 4
      %s101 = int_to_ptr.vmem [resolvable:$true] %s100
      %106 = dma.hbm_to_vmem [thread:$0]  %s6, 2048, %s101, [#allocation12], 128, 128, 8
    $region29: #{tpu_custom_call.1} parent=1 // pred_fallthru
      _
    // Predicated region
    $region30: #{tpu_custom_call.1} parent=1 // pred_check
      _
    $region31: #{tpu_custom_call.1} parent=1 // pred_check_branch
      %108 = sbr.rel (0) target = $region33
    $region32: #{tpu_custom_call.1} parent=1 // pred_region
      _
    $region33: #{tpu_custom_call.1} parent=1 // pred_fallthru
      _
    // Predicated region
    $region34: #{tpu_custom_call.1} parent=1 // pred_check
      _
    $region35: #{tpu_custom_call.1} parent=1 // pred_check_branch
      %110 = sbr.rel (0) target = $region37
    $region36: #{tpu_custom_call.1} parent=1 // pred_region
      %s112 = ssub.s32 2048, 2048
      %113 = vsyncadd [#allocation15], %s112
      %s114 = sshll.u32 [#allocation14], 4
      %s115 = int_to_ptr.vmem [resolvable:$true] %s114
      %120 = dma.hbm_to_vmem [thread:$0]  %s8, 2048, %s115, [#allocation15], 64, 64, 4
    $region37: #{tpu_custom_call.1} parent=1 // pred_fallthru
      _
    // Predicated region
    $region38: #{tpu_custom_call.1} parent=1 // pred_check
      _
    $region39: #{tpu_custom_call.1} parent=1 // pred_check_branch
      %122 = sbr.rel (0) target = $region41
    $region40: #{tpu_custom_call.1} parent=1 // pred_region
      _
    $region41: #{tpu_custom_call.1} parent=1 // pred_fallthru
      _
    // Predicated region
    $region42: #{tpu_custom_call.1} parent=1 // pred_check
      _
    $region43: #{tpu_custom_call.1} parent=1 // pred_check_branch
      %124 = sbr.rel (0) target = $region45
    $region44: #{tpu_custom_call.1} parent=1 // pred_region
      %s126 = ssub.s32 1024, 1024
      %127 = vsyncadd [#allocation15], %s126
      %s128 = sshll.u32 [#allocation16], 4
      %s129 = int_to_ptr.vmem [resolvable:$true] %s128
      %134 = dma.hbm_to_vmem [thread:$0]  %s10, 1024, %s129, [#allocation15], 64, 64, 4
    $region45: #{tpu_custom_call.1} parent=1 // pred_fallthru
      _
    // Predicated region
    $region46: #{tpu_custom_call.1} parent=1 // pred_check
      _
    $region47: #{tpu_custom_call.1} parent=1 // pred_check_branch
      %136 = sbr.rel (0) target = $region49
    $region48: #{tpu_custom_call.1} parent=1 // pred_region
      _
    $region49: #{tpu_custom_call.1} parent=1 // pred_fallthru
      _
    // Predicated region
    $region50: #{tpu_custom_call.1} parent=1 // pred_check
      _
    $region51: #{tpu_custom_call.1} parent=1 // pred_check_branch
      %138 = sbr.rel (0) target = $region53
    $region52: #{tpu_custom_call.1} parent=1 // pred_region
      %139 = dma.done [#allocation3], 256
    $region53: #{tpu_custom_call.1} parent=1 // pred_fallthru
      _
    // Predicated region
    $region54: #{tpu_custom_call.1} parent=1 // pred_check
      _
    $region55: #{tpu_custom_call.1} parent=1 // pred_check_branch
      %141 = sbr.rel (0) target = $region57
    $region56: #{tpu_custom_call.1} parent=1 // pred_region
      %142 = dma.done [#allocation6], 32
    $region57: #{tpu_custom_call.1} parent=1 // pred_fallthru
      _
    // Predicated region
    $region58: #{tpu_custom_call.1} parent=1 // pred_check
      _
    $region59: #{tpu_custom_call.1} parent=1 // pred_check_branch
      %144 = sbr.rel (0) target = $region61
    $region60: #{tpu_custom_call.1} parent=1 // pred_region
      %145 = dma.done [#allocation6], 1024
    $region61: #{tpu_custom_call.1} parent=1 // pred_fallthru
      _
    // Predicated region
    $region62: #{tpu_custom_call.1} parent=1 // pred_check
      _
    $region63: #{tpu_custom_call.1} parent=1 // pred_check_branch
      %147 = sbr.rel (0) target = $region65
    $region64: #{tpu_custom_call.1} parent=1 // pred_region
      %148 = dma.done [#allocation9], 1024
    $region65: #{tpu_custom_call.1} parent=1 // pred_fallthru
      _
    // Predicated region
    $region66: #{tpu_custom_call.1} parent=1 // pred_check
      _
    $region67: #{tpu_custom_call.1} parent=1 // pred_check_branch
      %150 = sbr.rel (0) target = $region69
    $region68: #{tpu_custom_call.1} parent=1 // pred_region
      %151 = dma.done [#allocation9], 1024
    $region69: #{tpu_custom_call.1} parent=1 // pred_fallthru
      _
    // Predicated region
    $region70: #{tpu_custom_call.1} parent=1 // pred_check
      _
    $region71: #{tpu_custom_call.1} parent=1 // pred_check_branch
      %153 = sbr.rel (0) target = $region73
    $region72: #{tpu_custom_call.1} parent=1 // pred_region
      %154 = dma.done [#allocation12], 1024
    $region73: #{tpu_custom_call.1} parent=1 // pred_fallthru
      _
    // Predicated region
    $region74: #{tpu_custom_call.1} parent=1 // pred_check
      _
    $region75: #{tpu_custom_call.1} parent=1 // pred_check_branch
      %156 = sbr.rel (0) target = $region77
    $region76: #{tpu_custom_call.1} parent=1 // pred_region
      %157 = dma.done [#allocation12], 2048
    $region77: #{tpu_custom_call.1} parent=1 // pred_fallthru
      _
    // Predicated region
    $region78: #{tpu_custom_call.1} parent=1 // pred_check
      _
    $region79: #{tpu_custom_call.1} parent=1 // pred_check_branch
      %159 = sbr.rel (0) target = $region81
    $region80: #{tpu_custom_call.1} parent=1 // pred_region
      %160 = dma.done [#allocation15], 2048
    $region81: #{tpu_custom_call.1} parent=1 // pred_fallthru
      _
    // Predicated region
    $region82: #{tpu_custom_call.1} parent=1 // pred_check
      _
    $region83: #{tpu_custom_call.1} parent=1 // pred_check_branch
      %162 = sbr.rel (0) target = $region85
    $region84: #{tpu_custom_call.1} parent=1 // pred_region
      %163 = dma.done [#allocation15], 1024
    $region85: #{tpu_custom_call.1} parent=1 // pred_fallthru
      _
    %v165 = vld [vmem:[#allocation2] sm:$0xff]
    %v166 = vld [vmem:[#allocation2 + $0x8] sm:$0xff]
    %v167 = vpack.c.bf16 %v166, %v165
    %v168 = vld [vmem:[#allocation7] sm:$0xf]
    %v169 = vld [vmem:[#allocation7 + $0x4] sm:$0xf]
    %v170 = vld [vmem:[#allocation7 + $0x8] sm:$0xf]
    %v171 = vld [vmem:[#allocation7 + $0xc] sm:$0xf]
    %v172 = vld [vmem:[#allocation7 + $0x10] sm:$0xf]
    %v173 = vld [vmem:[#allocation7 + $0x14] sm:$0xf]
    %v174 = vld [vmem:[#allocation7 + $0x18] sm:$0xf]
    %v175 = vld [vmem:[#allocation7 + $0x1c] sm:$0xf]
    %v176 = vld [vmem:[#allocation7 + $0x20] sm:$0xf]
    %v177 = vld [vmem:[#allocation7 + $0x24] sm:$0xf]
    %v178 = vld [vmem:[#allocation7 + $0x28] sm:$0xf]
    %v179 = vld [vmem:[#allocation7 + $0x2c] sm:$0xf]
    %v180 = vld [vmem:[#allocation7 + $0x30] sm:$0xf]
    %v181 = vld [vmem:[#allocation7 + $0x34] sm:$0xf]
    %v182 = vld [vmem:[#allocation7 + $0x38] sm:$0xf]
    %v183 = vld [vmem:[#allocation7 + $0x3c] sm:$0xf]
    %v200 = vunpack.c.l.b16 %v168
    %v201 = vunpack.c.l.b16 %v169
    %v202 = vunpack.c.l.b16 %v170
    %v203 = vunpack.c.l.b16 %v171
    %v204 = vunpack.c.l.b16 %v172
    %v205 = vunpack.c.l.b16 %v173
    %v206 = vunpack.c.l.b16 %v174
    %v207 = vunpack.c.l.b16 %v175
    %v208 = vunpack.c.l.b16 %v176
    %v209 = vunpack.c.l.b16 %v177
    %v210 = vunpack.c.l.b16 %v178
    %v211 = vunpack.c.l.b16 %v179
    %v212 = vunpack.c.l.b16 %v180
    %v213 = vunpack.c.l.b16 %v181
    %v214 = vunpack.c.l.b16 %v182
    %v215 = vunpack.c.l.b16 %v183
    %v216 = vpack.c.b16 %v201, %v200
    %v217 = vpack.c.b16 %v203, %v202
    %v218 = vpack.c.b16 %v205, %v204
    %v219 = vpack.c.b16 %v207, %v206
    %v220 = vpack.c.b16 %v209, %v208
    %v221 = vpack.c.b16 %v211, %v210
    %v222 = vpack.c.b16 %v213, %v212
    %v223 = vpack.c.b16 %v215, %v214
    %232 = vmatprep.subr.bf16.mxu0 0
    %233 = vmatpush1.bf16.msra.mxu0 %v223
    %234 = vmatprep.subr.bf16.mxu0 0
    %235 = vmatpush1.bf16.msra.mxu0 %v222
    %236 = vmatprep.subr.bf16.mxu0 0
    %237 = vmatpush1.bf16.msra.mxu0 %v221
    %238 = vmatprep.subr.bf16.mxu0 0
    %239 = vmatpush1.bf16.msra.mxu0 %v220
    %240 = vmatprep.subr.bf16.mxu0 0
    %241 = vmatpush1.bf16.msra.mxu0 %v219
    %242 = vmatprep.subr.bf16.mxu0 0
    %243 = vmatpush1.bf16.msra.mxu0 %v218
    %244 = vmatprep.subr.bf16.mxu0 0
    %245 = vmatpush1.bf16.msra.mxu0 %v217
    %246 = vmatprep.subr.bf16.mxu0 0
    %247 = vmatpush1.bf16.msra.mxu0 %v216
    %248 = vmatprep.subr.bf16.mxu0 0
    %249 = vmatpush2.bf16.msra.mxu0 0
    %250 = vmatprep.subr.bf16.mxu0 0
    %251 = vmatpush2.bf16.msra.mxu0 0
    %252 = vmatprep.subr.bf16.mxu0 0
    %253 = vmatpush2.bf16.msra.mxu0 0
    %254 = vmatprep.subr.bf16.mxu0 0
    %255 = vmatpush2.bf16.msra.mxu0 0
    %256 = vmatprep.subr.bf16.mxu0 0
    %257 = vmatpush2.bf16.msra.mxu0 0
    %258 = vmatprep.subr.bf16.mxu0 0
    %259 = vmatpush2.bf16.msra.mxu0 0
    %260 = vmatprep.subr.bf16.mxu0 0
    %261 = vmatpush2.bf16.msra.mxu0 0
    %262 = vmatprep.subr.bf16.mxu0 0
    %263 = vmatpush2.bf16.msra.mxu0 0
    %264 = vmatprep.mubr.bf16.mxu0 0
    %265 = vmatmul.mubr.bf16.gmra.mxu0 %v167
    %v266 = vpop.f32.mrf.mxu0
    %v267 = vadd.f32 0.0, %v266
    %v268 = vpop.f32.mrf.mxu0
    %v269 = vpop.f32.mrf.mxu0
    %v270 = vadd.f32 0.0, %v269
    %v271 = vpop.f32.mrf.mxu0
    %272 = vdwg.mxu0
    %v273 = vld [vmem:[#allocation8] sm:$0xf]
    %v274 = vld [vmem:[#allocation8 + $0x4] sm:$0xf]
    %v275 = vld [vmem:[#allocation8 + $0x8] sm:$0xf]
    %v276 = vld [vmem:[#allocation8 + $0xc] sm:$0xf]
    %v277 = vld [vmem:[#allocation8 + $0x10] sm:$0xf]
    %v278 = vld [vmem:[#allocation8 + $0x14] sm:$0xf]
    %v279 = vld [vmem:[#allocation8 + $0x18] sm:$0xf]
    %v280 = vld [vmem:[#allocation8 + $0x1c] sm:$0xf]
    %v281 = vld [vmem:[#allocation8 + $0x20] sm:$0xf]
    %v282 = vld [vmem:[#allocation8 + $0x24] sm:$0xf]
    %v283 = vld [vmem:[#allocation8 + $0x28] sm:$0xf]
    %v284 = vld [vmem:[#allocation8 + $0x2c] sm:$0xf]
    %v285 = vld [vmem:[#allocation8 + $0x30] sm:$0xf]
    %v286 = vld [vmem:[#allocation8 + $0x34] sm:$0xf]
    %v287 = vld [vmem:[#allocation8 + $0x38] sm:$0xf]
    %v288 = vld [vmem:[#allocation8 + $0x3c] sm:$0xf]
    %v305 = vunpack.c.l.b16 %v273
    %v306 = vunpack.c.l.b16 %v274
    %v307 = vunpack.c.l.b16 %v275
    %v308 = vunpack.c.l.b16 %v276
    %v309 = vunpack.c.l.b16 %v277
    %v310 = vunpack.c.l.b16 %v278
    %v311 = vunpack.c.l.b16 %v279
    %v312 = vunpack.c.l.b16 %v280
    %v313 = vunpack.c.l.b16 %v281
    %v314 = vunpack.c.l.b16 %v282
    %v315 = vunpack.c.l.b16 %v283
    %v316 = vunpack.c.l.b16 %v284
    %v317 = vunpack.c.l.b16 %v285
    %v318 = vunpack.c.l.b16 %v286
    %v319 = vunpack.c.l.b16 %v287
    %v320 = vunpack.c.l.b16 %v288
    %v321 = vpack.c.b16 %v306, %v305
    %v322 = vpack.c.b16 %v308, %v307
    %v323 = vpack.c.b16 %v310, %v309
    %v324 = vpack.c.b16 %v312, %v311
    %v325 = vpack.c.b16 %v314, %v313
    %v326 = vpack.c.b16 %v316, %v315
    %v327 = vpack.c.b16 %v318, %v317
    %v328 = vpack.c.b16 %v320, %v319
    %337 = vmatprep.subr.bf16.mxu0 0
    %338 = vmatpush1.bf16.msra.mxu0 %v328
    %339 = vmatprep.subr.bf16.mxu0 0
    %340 = vmatpush1.bf16.msra.mxu0 %v327
    %341 = vmatprep.subr.bf16.mxu0 0
    %342 = vmatpush1.bf16.msra.mxu0 %v326
    %343 = vmatprep.subr.bf16.mxu0 0
    %344 = vmatpush1.bf16.msra.mxu0 %v325
    %345 = vmatprep.subr.bf16.mxu0 0
    %346 = vmatpush1.bf16.msra.mxu0 %v324
    %347 = vmatprep.subr.bf16.mxu0 0
    %348 = vmatpush1.bf16.msra.mxu0 %v323
    %349 = vmatprep.subr.bf16.mxu0 0
    %350 = vmatpush1.bf16.msra.mxu0 %v322
    %351 = vmatprep.subr.bf16.mxu0 0
    %352 = vmatpush1.bf16.msra.mxu0 %v321
    %353 = vmatprep.subr.bf16.mxu0 0
    %354 = vmatpush2.bf16.msra.mxu0 0
    %355 = vmatprep.subr.bf16.mxu0 0
    %356 = vmatpush2.bf16.msra.mxu0 0
    %357 = vmatprep.subr.bf16.mxu0 0
    %358 = vmatpush2.bf16.msra.mxu0 0
    %359 = vmatprep.subr.bf16.mxu0 0
    %360 = vmatpush2.bf16.msra.mxu0 0
    %361 = vmatprep.subr.bf16.mxu0 0
    %362 = vmatpush2.bf16.msra.mxu0 0
    %363 = vmatprep.subr.bf16.mxu0 0
    %364 = vmatpush2.bf16.msra.mxu0 0
    %365 = vmatprep.subr.bf16.mxu0 0
    %366 = vmatpush2.bf16.msra.mxu0 0
    %367 = vmatprep.subr.bf16.mxu0 0
    %368 = vmatpush2.bf16.msra.mxu0 0
    %369 = vmatprep.mubr.bf16.mxu0 0
    %370 = vmatmul.mubr.bf16.gmra.mxu0 %v167
    %v371 = vpop.f32.mrf.mxu0
    %v372 = vadd.f32 0.0, %v371
    %v373 = vpop.f32.mrf.mxu0
    %v374 = vpop.f32.mrf.mxu0
    %v375 = vadd.f32 0.0, %v374
    %v376 = vpop.f32.mrf.mxu0
    %377 = vdwg.mxu0
    %v378 = vld [vmem:[#allocation10] sm:$0xf]
    %v379 = vld [vmem:[#allocation10 + $0x4] sm:$0xf]
    %v380 = vld [vmem:[#allocation10 + $0x8] sm:$0xf]
    %v381 = vld [vmem:[#allocation10 + $0xc] sm:$0xf]
    %v382 = vld [vmem:[#allocation10 + $0x10] sm:$0xf]
    %v383 = vld [vmem:[#allocation10 + $0x14] sm:$0xf]
    %v384 = vld [vmem:[#allocation10 + $0x18] sm:$0xf]
    %v385 = vld [vmem:[#allocation10 + $0x1c] sm:$0xf]
    %v386 = vld [vmem:[#allocation10 + $0x20] sm:$0xf]
    %v387 = vld [vmem:[#allocation10 + $0x24] sm:$0xf]
    %v388 = vld [vmem:[#allocation10 + $0x28] sm:$0xf]
    %v389 = vld [vmem:[#allocation10 + $0x2c] sm:$0xf]
    %v390 = vld [vmem:[#allocation10 + $0x30] sm:$0xf]
    %v391 = vld [vmem:[#allocation10 + $0x34] sm:$0xf]
    %v392 = vld [vmem:[#allocation10 + $0x38] sm:$0xf]
    %v393 = vld [vmem:[#allocation10 + $0x3c] sm:$0xf]
    %v410 = vunpack.c.l.b16 %v378
    %v411 = vunpack.c.l.b16 %v379
    %v412 = vunpack.c.l.b16 %v380
    %v413 = vunpack.c.l.b16 %v381
    %v414 = vunpack.c.l.b16 %v382
    %v415 = vunpack.c.l.b16 %v383
    %v416 = vunpack.c.l.b16 %v384
    %v417 = vunpack.c.l.b16 %v385
    %v418 = vunpack.c.l.b16 %v386
    %v419 = vunpack.c.l.b16 %v387
    %v420 = vunpack.c.l.b16 %v388
    %v421 = vunpack.c.l.b16 %v389
    %v422 = vunpack.c.l.b16 %v390
    %v423 = vunpack.c.l.b16 %v391
    %v424 = vunpack.c.l.b16 %v392
    %v425 = vunpack.c.l.b16 %v393
    %v426 = vpack.c.b16 %v411, %v410
    %v427 = vpack.c.b16 %v413, %v412
    %v428 = vpack.c.b16 %v415, %v414
    %v429 = vpack.c.b16 %v417, %v416
    %v430 = vpack.c.b16 %v419, %v418
    %v431 = vpack.c.b16 %v421, %v420
    %v432 = vpack.c.b16 %v423, %v422
    %v433 = vpack.c.b16 %v425, %v424
    %442 = vmatprep.subr.bf16.mxu0 0
    %443 = vmatpush1.bf16.msra.mxu0 %v433
    %444 = vmatprep.subr.bf16.mxu0 0
    %445 = vmatpush1.bf16.msra.mxu0 %v432
    %446 = vmatprep.subr.bf16.mxu0 0
    %447 = vmatpush1.bf16.msra.mxu0 %v431
    %448 = vmatprep.subr.bf16.mxu0 0
    %449 = vmatpush1.bf16.msra.mxu0 %v430
    %450 = vmatprep.subr.bf16.mxu0 0
    %451 = vmatpush1.bf16.msra.mxu0 %v429
    %452 = vmatprep.subr.bf16.mxu0 0
    %453 = vmatpush1.bf16.msra.mxu0 %v428
    %454 = vmatprep.subr.bf16.mxu0 0
    %455 = vmatpush1.bf16.msra.mxu0 %v427
    %456 = vmatprep.subr.bf16.mxu0 0
    %457 = vmatpush1.bf16.msra.mxu0 %v426
    %458 = vmatprep.subr.bf16.mxu0 0
    %459 = vmatpush2.bf16.msra.mxu0 0
    %460 = vmatprep.subr.bf16.mxu0 0
    %461 = vmatpush2.bf16.msra.mxu0 0
    %462 = vmatprep.subr.bf16.mxu0 0
    %463 = vmatpush2.bf16.msra.mxu0 0
    %464 = vmatprep.subr.bf16.mxu0 0
    %465 = vmatpush2.bf16.msra.mxu0 0
    %466 = vmatprep.subr.bf16.mxu0 0
    %467 = vmatpush2.bf16.msra.mxu0 0
    %468 = vmatprep.subr.bf16.mxu0 0
    %469 = vmatpush2.bf16.msra.mxu0 0
    %470 = vmatprep.subr.bf16.mxu0 0
    %471 = vmatpush2.bf16.msra.mxu0 0
    %472 = vmatprep.subr.bf16.mxu0 0
    %473 = vmatpush2.bf16.msra.mxu0 0
    %474 = vmatprep.mubr.bf16.mxu0 0
    %475 = vmatmul.mubr.bf16.gmra.mxu0 %v167
    %v476 = vpop.f32.mrf.mxu0
    %v477 = vadd.f32 0.0, %v476
    %v478 = vpop.f32.mrf.mxu0
    %v479 = vpop.f32.mrf.mxu0
    %v480 = vadd.f32 0.0, %v479
    %v481 = vpop.f32.mrf.mxu0
    %482 = vdwg.mxu0
    %v483 = vpack.c.bf16 %v267, %v267
    %v484 = vpack.c.bf16 %v270, %v270
    %v485 = vpack.c.bf16 %v372, %v372
    %v486 = vpack.c.bf16 %v375, %v375
    %v487 = vpack.c.bf16 %v477, %v477
    %v488 = vpack.c.bf16 %v480, %v480
    %489 = vmatprep.subr.bf16.mxu0 0
    %490 = vmatpush1.bf16.xpose.msra.mxu0 0
    %491 = vmatprep.subr.bf16.mxu0 0
    %492 = vmatpush1.bf16.xpose.msra.mxu0 0
    %493 = vmatprep.subr.bf16.mxu0 0
    %494 = vmatpush1.bf16.xpose.msra.mxu0 0
    %495 = vmatprep.subr.bf16.mxu0 0
    %496 = vmatpush1.bf16.xpose.msra.mxu0 0
    %497 = vmatprep.subr.bf16.mxu0 0
    %498 = vmatpush1.bf16.xpose.msra.mxu0 0
    %499 = vmatprep.subr.bf16.mxu0 0
    %500 = vmatpush1.bf16.xpose.msra.mxu0 0
    %501 = vmatprep.subr.bf16.mxu0 0
    %502 = vmatpush1.bf16.xpose.msra.mxu0 0
    %503 = vmatprep.subr.bf16.mxu0 0
    %504 = vmatpush1.bf16.xpose.msra.mxu0 %v485
    %505 = vmatprep.subr.bf16.mxu0 0
    %506 = vmatpush2.bf16.xpose.msra.mxu0 0
    %507 = vmatprep.subr.bf16.mxu0 0
    %508 = vmatpush2.bf16.xpose.msra.mxu0 0
    %509 = vmatprep.subr.bf16.mxu0 0
    %510 = vmatpush2.bf16.xpose.msra.mxu0 0
    %511 = vmatprep.subr.bf16.mxu0 0
    %512 = vmatpush2.bf16.xpose.msra.mxu0 0
    %513 = vmatprep.subr.bf16.mxu0 0
    %514 = vmatpush2.bf16.xpose.msra.mxu0 0
    %515 = vmatprep.subr.bf16.mxu0 0
    %516 = vmatpush2.bf16.xpose.msra.mxu0 0
    %517 = vmatprep.subr.bf16.mxu0 0
    %518 = vmatpush2.bf16.xpose.msra.mxu0 0
    %519 = vmatprep.subr.bf16.mxu0 0
    %520 = vmatpush2.bf16.xpose.msra.mxu0 0
    %521 = vmatprep.mubr.bf16.mxu0 0
    %522 = vmatmul.mubr.bf16.gmra.mxu0 %v483
    %v523 = vpop.f32.mrf.mxu0
    %v524 = vadd.f32 0.0, %v523
    %v525 = vpop.f32.mrf.mxu0
    %v526 = vpop.f32.mrf.mxu0
    %v527 = vpop.f32.mrf.mxu0
    %528 = vdwg.mxu0
    %529 = vmatprep.subr.bf16.mxu0 0
    %530 = vmatpush1.bf16.xpose.msra.mxu0 0
    %531 = vmatprep.subr.bf16.mxu0 0
    %532 = vmatpush1.bf16.xpose.msra.mxu0 0
    %533 = vmatprep.subr.bf16.mxu0 0
    %534 = vmatpush1.bf16.xpose.msra.mxu0 0
    %535 = vmatprep.subr.bf16.mxu0 0
    %536 = vmatpush1.bf16.xpose.msra.mxu0 0
    %537 = vmatprep.subr.bf16.mxu0 0
    %538 = vmatpush1.bf16.xpose.msra.mxu0 0
    %539 = vmatprep.subr.bf16.mxu0 0
    %540 = vmatpush1.bf16.xpose.msra.mxu0 0
    %541 = vmatprep.subr.bf16.mxu0 0
    %542 = vmatpush1.bf16.xpose.msra.mxu0 0
    %543 = vmatprep.subr.bf16.mxu0 0
    %544 = vmatpush1.bf16.xpose.msra.mxu0 %v486
    %545 = vmatprep.subr.bf16.mxu0 0
    %546 = vmatpush2.bf16.xpose.msra.mxu0 0
    %547 = vmatprep.subr.bf16.mxu0 0
    %548 = vmatpush2.bf16.xpose.msra.mxu0 0
    %549 = vmatprep.subr.bf16.mxu0 0
    %550 = vmatpush2.bf16.xpose.msra.mxu0 0
    %551 = vmatprep.subr.bf16.mxu0 0
    %552 = vmatpush2.bf16.xpose.msra.mxu0 0
    %553 = vmatprep.subr.bf16.mxu0 0
    %554 = vmatpush2.bf16.xpose.msra.mxu0 0
    %555 = vmatprep.subr.bf16.mxu0 0
    %556 = vmatpush2.bf16.xpose.msra.mxu0 0
    %557 = vmatprep.subr.bf16.mxu0 0
    %558 = vmatpush2.bf16.xpose.msra.mxu0 0
    %559 = vmatprep.subr.bf16.mxu0 0
    %560 = vmatpush2.bf16.xpose.msra.mxu0 0
    %561 = vmatprep.mubr.bf16.mxu0 0
    %562 = vmatmul.mubr.bf16.gmra.mxu0 %v484
    %v563 = vpop.f32.mrf.mxu0
    %v564 = vadd.f32 0.0, %v563
    %v565 = vpop.f32.mrf.mxu0
    %v566 = vpop.f32.mrf.mxu0
    %v567 = vpop.f32.mrf.mxu0
    %568 = vdwg.mxu0
    %v569 = vmul.f32 %v524, 0.088388346
    %v570 = vmul.f32 %v564, 0.088388346
    %v571 = vld [vmem:[#allocation5] sm:$0x1]
    %v572 = vld [vmem:[#allocation5 + $0x1] sm:$0x1]
    %v573 = vsub.f32 1.0, %v571
    %v574 = vsub.f32 1.0, %v572
    %v575 = vmul.f32 %v573, -1e+09
    %v576 = vmul.f32 %v574, -1e+09
    %v579 = vlaneseq
    %v580 = vshrl.u32 %v579, 7
    %v581 = vsub.s32 0, %v580
    %v582 = vrot.slane %v575, %v581
    %v583 = vlaneseq
    %v584 = vshrl.u32 %v583, 7
    %v585 = vsub.s32 0, %v584
    %v586 = vrot.slane %v576, %v585
    %v589 = vadd.f32 %v569, %v582
    %v590 = vadd.f32 %v570, %v586
    %vm591 = vcmask 64512
    %v592 = vsel %vm591, %v589, -inf
    %593 = vmax.xlane.f32.xlu0 %v592
    %v594 = vpop.xlane.xlu0 %593
    %v595 = vsel %vm591, %v590, -inf
    %596 = vmax.xlane.f32.xlu0 %v595
    %v597 = vpop.xlane.xlu0 %596
    %v598 = vsub.f32 %v589, %v594
    %v599 = vsub.f32 %v590, %v597
    %v600 = vmul.f32 %v598, 1.442695
    %v601 = vpow.pop %v600
    %v602 = vmul.f32 %v599, 1.442695
    %v603 = vpow.pop %v602
    %v604 = vsel %vm591, %v601, 0.0
    %605 = vadd.xlane.f32.xlu0 %v604
    %v606 = vpop.xlane.xlu0 %605
    %v607 = vsel %vm591, %v603, 0.0
    %608 = vadd.xlane.f32.xlu0 %v607
    %v609 = vpop.xlane.xlu0 %608
    %v610 = vrcp.pop %v606
    %v611 = vrcp.pop %v609
    %v612 = vmul.f32 %v601, %v610
    %v613 = vmul.f32 %v603, %v611
    %v614 = vpack.c.bf16 %v612, %v612
    %v615 = vpack.c.bf16 %v613, %v613
    %v617 = vsel %vm591, %v614, 0
    %vm619 = vcmask 1043456
    %v621 = vsel %vm619, %v487, 0
    %623 = vmatprep.subr.bf16.mxu0 0
    %624 = vmatpush1.bf16.msra.mxu0 0
    %625 = vmatprep.subr.bf16.mxu0 0
    %626 = vmatpush1.bf16.msra.mxu0 0
    %627 = vmatprep.subr.bf16.mxu0 0
    %628 = vmatpush1.bf16.msra.mxu0 0
    %629 = vmatprep.subr.bf16.mxu0 0
    %630 = vmatpush1.bf16.msra.mxu0 0
    %631 = vmatprep.subr.bf16.mxu0 0
    %632 = vmatpush1.bf16.msra.mxu0 0
    %633 = vmatprep.subr.bf16.mxu0 0
    %634 = vmatpush1.bf16.msra.mxu0 0
    %635 = vmatprep.subr.bf16.mxu0 0
    %636 = vmatpush1.bf16.msra.mxu0 0
    %637 = vmatprep.subr.bf16.mxu0 0
    %638 = vmatpush1.bf16.msra.mxu0 %v621
    %639 = vmatprep.subr.bf16.mxu0 0
    %640 = vmatpush2.bf16.msra.mxu0 0
    %641 = vmatprep.subr.bf16.mxu0 0
    %642 = vmatpush2.bf16.msra.mxu0 0
    %643 = vmatprep.subr.bf16.mxu0 0
    %644 = vmatpush2.bf16.msra.mxu0 0
    %645 = vmatprep.subr.bf16.mxu0 0
    %646 = vmatpush2.bf16.msra.mxu0 0
    %647 = vmatprep.subr.bf16.mxu0 0
    %648 = vmatpush2.bf16.msra.mxu0 0
    %649 = vmatprep.subr.bf16.mxu0 0
    %650 = vmatpush2.bf16.msra.mxu0 0
    %651 = vmatprep.subr.bf16.mxu0 0
    %652 = vmatpush2.bf16.msra.mxu0 0
    %653 = vmatprep.subr.bf16.mxu0 0
    %654 = vmatpush2.bf16.msra.mxu0 0
    %655 = vmatprep.mubr.bf16.mxu0 0
    %656 = vmatmul.mubr.bf16.gmra.mxu0 %v617
    %v657 = vpop.f32.mrf.mxu0
    %v658 = vadd.f32 0.0, %v657
    %v659 = vpop.f32.mrf.mxu0
    %v660 = vpop.f32.mrf.mxu0
    %v661 = vpop.f32.mrf.mxu0
    %662 = vdwg.mxu0
    %v664 = vsel %vm591, %v615, 0
    %v667 = vsel %vm619, %v488, 0
    %669 = vmatprep.subr.bf16.mxu0 0
    %670 = vmatpush1.bf16.msra.mxu0 0
    %671 = vmatprep.subr.bf16.mxu0 0
    %672 = vmatpush1.bf16.msra.mxu0 0
    %673 = vmatprep.subr.bf16.mxu0 0
    %674 = vmatpush1.bf16.msra.mxu0 0
    %675 = vmatprep.subr.bf16.mxu0 0
    %676 = vmatpush1.bf16.msra.mxu0 0
    %677 = vmatprep.subr.bf16.mxu0 0
    %678 = vmatpush1.bf16.msra.mxu0 0
    %679 = vmatprep.subr.bf16.mxu0 0
    %680 = vmatpush1.bf16.msra.mxu0 0
    %681 = vmatprep.subr.bf16.mxu0 0
    %682 = vmatpush1.bf16.msra.mxu0 0
    %683 = vmatprep.subr.bf16.mxu0 0
    %684 = vmatpush1.bf16.msra.mxu0 %v667
    %685 = vmatprep.subr.bf16.mxu0 0
    %686 = vmatpush2.bf16.msra.mxu0 0
    %687 = vmatprep.subr.bf16.mxu0 0
    %688 = vmatpush2.bf16.msra.mxu0 0
    %689 = vmatprep.subr.bf16.mxu0 0
    %690 = vmatpush2.bf16.msra.mxu0 0
    %691 = vmatprep.subr.bf16.mxu0 0
    %692 = vmatpush2.bf16.msra.mxu0 0
    %693 = vmatprep.subr.bf16.mxu0 0
    %694 = vmatpush2.bf16.msra.mxu0 0
    %695 = vmatprep.subr.bf16.mxu0 0
    %696 = vmatpush2.bf16.msra.mxu0 0
    %697 = vmatprep.subr.bf16.mxu0 0
    %698 = vmatpush2.bf16.msra.mxu0 0
    %699 = vmatprep.subr.bf16.mxu0 0
    %700 = vmatpush2.bf16.msra.mxu0 0
    %701 = vmatprep.mubr.bf16.mxu0 0
    %702 = vmatmul.mubr.bf16.gmra.mxu0 %v664
    %v703 = vpop.f32.mrf.mxu0
    %v704 = vadd.f32 0.0, %v703
    %v705 = vpop.f32.mrf.mxu0
    %v706 = vpop.f32.mrf.mxu0
    %v707 = vpop.f32.mrf.mxu0
    %708 = vdwg.mxu0
    %v709 = vpack.c.bf16 %v704, %v658
    %v710 = vld [vmem:[#allocation11] sm:$0xf]
    %v711 = vld [vmem:[#allocation11 + $0x4] sm:$0xf]
    %v712 = vld [vmem:[#allocation11 + $0x8] sm:$0xf]
    %v713 = vld [vmem:[#allocation11 + $0xc] sm:$0xf]
    %v714 = vld [vmem:[#allocation11 + $0x10] sm:$0xf]
    %v715 = vld [vmem:[#allocation11 + $0x14] sm:$0xf]
    %v716 = vld [vmem:[#allocation11 + $0x18] sm:$0xf]
    %v717 = vld [vmem:[#allocation11 + $0x1c] sm:$0xf]
    %v718 = vld [vmem:[#allocation11 + $0x20] sm:$0xf]
    %v719 = vld [vmem:[#allocation11 + $0x24] sm:$0xf]
    %v720 = vld [vmem:[#allocation11 + $0x28] sm:$0xf]
    %v721 = vld [vmem:[#allocation11 + $0x2c] sm:$0xf]
    %v722 = vld [vmem:[#allocation11 + $0x30] sm:$0xf]
    %v723 = vld [vmem:[#allocation11 + $0x34] sm:$0xf]
    %v724 = vld [vmem:[#allocation11 + $0x38] sm:$0xf]
    %v725 = vld [vmem:[#allocation11 + $0x3c] sm:$0xf]
    %v742 = vunpack.c.l.b16 %v710
    %v743 = vunpack.c.l.b16 %v711
    %v744 = vunpack.c.l.b16 %v712
    %v745 = vunpack.c.l.b16 %v713
    %v746 = vunpack.c.l.b16 %v714
    %v747 = vunpack.c.l.b16 %v715
    %v748 = vunpack.c.l.b16 %v716
    %v749 = vunpack.c.l.b16 %v717
    %v750 = vunpack.c.l.b16 %v718
    %v751 = vunpack.c.l.b16 %v719
    %v752 = vunpack.c.l.b16 %v720
    %v753 = vunpack.c.l.b16 %v721
    %v754 = vunpack.c.l.b16 %v722
    %v755 = vunpack.c.l.b16 %v723
    %v756 = vunpack.c.l.b16 %v724
    %v757 = vunpack.c.l.b16 %v725
    %v758 = vpack.c.b16 %v743, %v742
    %v759 = vpack.c.b16 %v745, %v744
    %v760 = vpack.c.b16 %v747, %v746
    %v761 = vpack.c.b16 %v749, %v748
    %v762 = vpack.c.b16 %v751, %v750
    %v763 = vpack.c.b16 %v753, %v752
    %v764 = vpack.c.b16 %v755, %v754
    %v765 = vpack.c.b16 %v757, %v756
    %774 = vmatprep.subr.bf16.mxu0 0
    %775 = vmatpush1.bf16.msra.mxu0 %v765
    %776 = vmatprep.subr.bf16.mxu0 0
    %777 = vmatpush1.bf16.msra.mxu0 %v764
    %778 = vmatprep.subr.bf16.mxu0 0
    %779 = vmatpush1.bf16.msra.mxu0 %v763
    %780 = vmatprep.subr.bf16.mxu0 0
    %781 = vmatpush1.bf16.msra.mxu0 %v762
    %782 = vmatprep.subr.bf16.mxu0 0
    %783 = vmatpush1.bf16.msra.mxu0 %v761
    %784 = vmatprep.subr.bf16.mxu0 0
    %785 = vmatpush1.bf16.msra.mxu0 %v760
    %786 = vmatprep.subr.bf16.mxu0 0
    %787 = vmatpush1.bf16.msra.mxu0 %v759
    %788 = vmatprep.subr.bf16.mxu0 0
    %789 = vmatpush1.bf16.msra.mxu0 %v758
    %790 = vmatprep.subr.bf16.mxu0 0
    %791 = vmatpush2.bf16.msra.mxu0 0
    %792 = vmatprep.subr.bf16.mxu0 0
    %793 = vmatpush2.bf16.msra.mxu0 0
    %794 = vmatprep.subr.bf16.mxu0 0
    %795 = vmatpush2.bf16.msra.mxu0 0
    %796 = vmatprep.subr.bf16.mxu0 0
    %797 = vmatpush2.bf16.msra.mxu0 0
    %798 = vmatprep.subr.bf16.mxu0 0
    %799 = vmatpush2.bf16.msra.mxu0 0
    %800 = vmatprep.subr.bf16.mxu0 0
    %801 = vmatpush2.bf16.msra.mxu0 0
    %802 = vmatprep.subr.bf16.mxu0 0
    %803 = vmatpush2.bf16.msra.mxu0 0
    %804 = vmatprep.subr.bf16.mxu0 0
    %805 = vmatpush2.bf16.msra.mxu0 0
    %806 = vmatprep.mubr.bf16.mxu0 0
    %807 = vmatmul.mubr.bf16.gmra.mxu0 %v709
    %v808 = vpop.f32.mrf.mxu0
    %v809 = vadd.f32 0.0, %v808
    %v810 = vpop.f32.mrf.mxu0
    %v811 = vpop.f32.mrf.mxu0
    %v812 = vadd.f32 0.0, %v811
    %v813 = vpop.f32.mrf.mxu0
    %814 = vdwg.mxu0
    %v815 = vadd.f32 %v165, %v809
    %v816 = vadd.f32 %v166, %v812
    %817 = vadd.xlane.f32.xlu0 %v815
    %v818 = vpop.xlane.xlu0 %817
    %819 = vadd.xlane.f32.xlu0 %v816
    %v820 = vpop.xlane.xlu0 %819
    %v821 = vrcp.pop 128.0
    %v822 = vmul.f32 %v818, %v821
    %v823 = vmul.f32 %v820, %v821
    %v824 = vsub.f32 %v815, %v822
    %v825 = vsub.f32 %v816, %v823
    %v826 = vmul.f32 %v824, %v824
    %v827 = vmul.f32 %v825, %v825
    %828 = vadd.xlane.f32.xlu0 %v826
    %v829 = vpop.xlane.xlu0 %828
    %830 = vadd.xlane.f32.xlu0 %v827
    %v831 = vpop.xlane.xlu0 %830
    %v832 = vmul.f32 %v829, %v821
    %v833 = vmul.f32 %v831, %v821
    %v834 = vadd.f32 %v832, 1e-05
    %v835 = vadd.f32 %v833, 1e-05
    %v836 = vrsqrt.pop %v834
    %v837 = vrsqrt.pop %v835
    %v838 = vmul.f32 %v824, %v836
    %v839 = vmul.f32 %v825, %v837
    %v840 = vpack.c.bf16 %v839, %v838
    %v841 = vld [vmem:[#allocation13] sm:$0xff]
    %v842 = vld [vmem:[#allocation13 + $0x8] sm:$0xff]
    %v843 = vld [vmem:[#allocation13 + $0x10] sm:$0xff]
    %v844 = vld [vmem:[#allocation13 + $0x18] sm:$0xff]
    %v845 = vld [vmem:[#allocation13 + $0x20] sm:$0xff]
    %v846 = vld [vmem:[#allocation13 + $0x28] sm:$0xff]
    %v847 = vld [vmem:[#allocation13 + $0x30] sm:$0xff]
    %v848 = vld [vmem:[#allocation13 + $0x38] sm:$0xff]
    %v849 = vld [vmem:[#allocation13 + $0x40] sm:$0xff]
    %v850 = vld [vmem:[#allocation13 + $0x48] sm:$0xff]
    %v851 = vld [vmem:[#allocation13 + $0x50] sm:$0xff]
    %v852 = vld [vmem:[#allocation13 + $0x58] sm:$0xff]
    %v853 = vld [vmem:[#allocation13 + $0x60] sm:$0xff]
    %v854 = vld [vmem:[#allocation13 + $0x68] sm:$0xff]
    %v855 = vld [vmem:[#allocation13 + $0x70] sm:$0xff]
    %v856 = vld [vmem:[#allocation13 + $0x78] sm:$0xff]
    %v857 = vld [vmem:[%s7] sm:$0x3]
    %v859 = vlaneseq
    %v860 = vshrl.u32 %v859, 7
    %v861 = vsub.s32 0, %v860
    %v862 = vrot.slane %v857, %v861
    %v863 = vlaneseq
    %v864 = vshrl.u32 %v863, 7
    %v865 = vsub.s32 1, %v864
    %v866 = vrot.slane %v857, %v865
    %v885 = vunpack.c.l.b16 %v841
    %v886 = vunpack.c.h.b16 %v841
    %v887 = vunpack.c.l.b16 %v842
    %v888 = vunpack.c.h.b16 %v842
    %v889 = vunpack.c.l.b16 %v843
    %v890 = vunpack.c.h.b16 %v843
    %v891 = vunpack.c.l.b16 %v844
    %v892 = vunpack.c.h.b16 %v844
    %v893 = vunpack.c.l.b16 %v845
    %v894 = vunpack.c.h.b16 %v845
    %v895 = vunpack.c.l.b16 %v846
    %v896 = vunpack.c.h.b16 %v846
    %v897 = vunpack.c.l.b16 %v847
    %v898 = vunpack.c.h.b16 %v847
    %v899 = vunpack.c.l.b16 %v848
    %v900 = vunpack.c.h.b16 %v848
    %v901 = vunpack.c.l.b16 %v849
    %v902 = vunpack.c.h.b16 %v849
    %v903 = vunpack.c.l.b16 %v850
    %v904 = vunpack.c.h.b16 %v850
    %v905 = vunpack.c.l.b16 %v851
    %v906 = vunpack.c.h.b16 %v851
    %v907 = vunpack.c.l.b16 %v852
    %v908 = vunpack.c.h.b16 %v852
    %v909 = vunpack.c.l.b16 %v853
    %v910 = vunpack.c.h.b16 %v853
    %v911 = vunpack.c.l.b16 %v854
    %v912 = vunpack.c.h.b16 %v854
    %v913 = vunpack.c.l.b16 %v855
    %v914 = vunpack.c.h.b16 %v855
    %v915 = vunpack.c.l.b16 %v856
    %v916 = vunpack.c.h.b16 %v856
    %v917 = vpack.c.b16 %v887, %v885
    %v918 = vpack.c.b16 %v888, %v886
    %v919 = vpack.c.b16 %v891, %v889
    %v920 = vpack.c.b16 %v892, %v890
    %v921 = vpack.c.b16 %v895, %v893
    %v922 = vpack.c.b16 %v896, %v894
    %v923 = vpack.c.b16 %v899, %v897
    %v924 = vpack.c.b16 %v900, %v898
    %v925 = vpack.c.b16 %v903, %v901
    %v926 = vpack.c.b16 %v904, %v902
    %v927 = vpack.c.b16 %v907, %v905
    %v928 = vpack.c.b16 %v908, %v906
    %v929 = vpack.c.b16 %v911, %v909
    %v930 = vpack.c.b16 %v912, %v910
    %v931 = vpack.c.b16 %v915, %v913
    %v932 = vpack.c.b16 %v916, %v914
    %949 = vmatprep.subr.bf16.mxu0 %v932
    %950 = vmatpush1.bf16.msra.mxu0 %v931
    %951 = vmatprep.subr.bf16.mxu0 %v930
    %952 = vmatpush1.bf16.msra.mxu0 %v929
    %953 = vmatprep.subr.bf16.mxu0 %v928
    %954 = vmatpush1.bf16.msra.mxu0 %v927
    %955 = vmatprep.subr.bf16.mxu0 %v926
    %956 = vmatpush1.bf16.msra.mxu0 %v925
    %957 = vmatprep.subr.bf16.mxu0 %v924
    %958 = vmatpush1.bf16.msra.mxu0 %v923
    %959 = vmatprep.subr.bf16.mxu0 %v922
    %960 = vmatpush1.bf16.msra.mxu0 %v921
    %961 = vmatprep.subr.bf16.mxu0 %v920
    %962 = vmatpush1.bf16.msra.mxu0 %v919
    %963 = vmatprep.subr.bf16.mxu0 %v918
    %964 = vmatpush1.bf16.msra.mxu0 %v917
    %965 = vmatprep.subr.bf16.mxu0 0
    %966 = vmatpush2.bf16.msra.mxu0 0
    %967 = vmatprep.subr.bf16.mxu0 0
    %968 = vmatpush2.bf16.msra.mxu0 0
    %969 = vmatprep.subr.bf16.mxu0 0
    %970 = vmatpush2.bf16.msra.mxu0 0
    %971 = vmatprep.subr.bf16.mxu0 0
    %972 = vmatpush2.bf16.msra.mxu0 0
    %973 = vmatprep.subr.bf16.mxu0 0
    %974 = vmatpush2.bf16.msra.mxu0 0
    %975 = vmatprep.subr.bf16.mxu0 0
    %976 = vmatpush2.bf16.msra.mxu0 0
    %977 = vmatprep.subr.bf16.mxu0 0
    %978 = vmatpush2.bf16.msra.mxu0 0
    %979 = vmatprep.subr.bf16.mxu0 0
    %980 = vmatpush2.bf16.msra.mxu0 0
    %981 = vmatprep.mubr.bf16.mxu0 0
    %982 = vmatmul.mubr.bf16.gmra.mxu0 %v840
    %v983 = vpop.f32.mrf.mxu0
    %v984 = vadd.f32 %v862, %v983
    %v985 = vpop.f32.mrf.mxu0
    %v986 = vadd.f32 %v866, %v985
    %v987 = vpop.f32.mrf.mxu0
    %v988 = vadd.f32 %v862, %v987
    %v989 = vpop.f32.mrf.mxu0
    %v990 = vadd.f32 %v866, %v989
    %991 = vdwg.mxu0
    %v992 = vmul.f32 %v984, %v984
    %v993 = vmul.f32 %v986, %v986
    %v994 = vmul.f32 %v988, %v988
    %v995 = vmul.f32 %v990, %v990
    %v996 = vmul.f32 %v984, %v992
    %v997 = vmul.f32 %v986, %v993
    %v998 = vmul.f32 %v988, %v994
    %v999 = vmul.f32 %v990, %v995
    %v1000 = vmul.f32 %v996, 0.044715
    %v1001 = vmul.f32 %v997, 0.044715
    %v1002 = vmul.f32 %v998, 0.044715
    %v1003 = vmul.f32 %v999, 0.044715
    %v1004 = vadd.f32 %v984, %v1000
    %v1005 = vadd.f32 %v986, %v1001
    %v1006 = vadd.f32 %v988, %v1002
    %v1007 = vadd.f32 %v990, %v1003
    %v1008 = vmul.f32 %v1004, 0.7978846
    %v1009 = vmul.f32 %v1005, 0.7978846
    %v1010 = vmul.f32 %v1006, 0.7978846
    %v1011 = vmul.f32 %v1007, 0.7978846
    %v1012 = vtanh.pop %v1008
    %v1013 = vtanh.pop %v1009
    %v1014 = vtanh.pop %v1010
    %v1015 = vtanh.pop %v1011
    %v1016 = vadd.f32 %v1012, 1.0
    %v1017 = vadd.f32 %v1013, 1.0
    %v1018 = vadd.f32 %v1014, 1.0
    %v1019 = vadd.f32 %v1015, 1.0
    %v1020 = vmul.f32 %v1016, 0.5
    %v1021 = vmul.f32 %v1017, 0.5
    %v1022 = vmul.f32 %v1018, 0.5
    %v1023 = vmul.f32 %v1019, 0.5
    %v1024 = vmul.f32 %v984, %v1020
    %v1025 = vmul.f32 %v986, %v1021
    %v1026 = vmul.f32 %v988, %v1022
    %v1027 = vmul.f32 %v990, %v1023
    %v1028 = vpack.c.bf16 %v1026, %v1024
    %v1029 = vpack.c.bf16 %v1027, %v1025
    %v1030 = vld [vmem:[#allocation14] sm:$0xf]
    %v1031 = vld [vmem:[#allocation14 + $0x4] sm:$0xf]
    %v1032 = vld [vmem:[#allocation14 + $0x8] sm:$0xf]
    %v1033 = vld [vmem:[#allocation14 + $0xc] sm:$0xf]
    %v1034 = vld [vmem:[#allocation14 + $0x10] sm:$0xf]
    %v1035 = vld [vmem:[#allocation14 + $0x14] sm:$0xf]
    %v1036 = vld [vmem:[#allocation14 + $0x18] sm:$0xf]
    %v1037 = vld [vmem:[#allocation14 + $0x1c] sm:$0xf]
    %v1038 = vld [vmem:[#allocation14 + $0x20] sm:$0xf]
    %v1039 = vld [vmem:[#allocation14 + $0x24] sm:$0xf]
    %v1040 = vld [vmem:[#allocation14 + $0x28] sm:$0xf]
    %v1041 = vld [vmem:[#allocation14 + $0x2c] sm:$0xf]
    %v1042 = vld [vmem:[#allocation14 + $0x30] sm:$0xf]
    %v1043 = vld [vmem:[#allocation14 + $0x34] sm:$0xf]
    %v1044 = vld [vmem:[#allocation14 + $0x38] sm:$0xf]
    %v1045 = vld [vmem:[#allocation14 + $0x3c] sm:$0xf]
    %v1046 = vld [vmem:[#allocation14 + $0x40] sm:$0xf]
    %v1047 = vld [vmem:[#allocation14 + $0x44] sm:$0xf]
    %v1048 = vld [vmem:[#allocation14 + $0x48] sm:$0xf]
    %v1049 = vld [vmem:[#allocation14 + $0x4c] sm:$0xf]
    %v1050 = vld [vmem:[#allocation14 + $0x50] sm:$0xf]
    %v1051 = vld [vmem:[#allocation14 + $0x54] sm:$0xf]
    %v1052 = vld [vmem:[#allocation14 + $0x58] sm:$0xf]
    %v1053 = vld [vmem:[#allocation14 + $0x5c] sm:$0xf]
    %v1054 = vld [vmem:[#allocation14 + $0x60] sm:$0xf]
    %v1055 = vld [vmem:[#allocation14 + $0x64] sm:$0xf]
    %v1056 = vld [vmem:[#allocation14 + $0x68] sm:$0xf]
    %v1057 = vld [vmem:[#allocation14 + $0x6c] sm:$0xf]
    %v1058 = vld [vmem:[#allocation14 + $0x70] sm:$0xf]
    %v1059 = vld [vmem:[#allocation14 + $0x74] sm:$0xf]
    %v1060 = vld [vmem:[#allocation14 + $0x78] sm:$0xf]
    %v1061 = vld [vmem:[#allocation14 + $0x7c] sm:$0xf]
    %v1062 = vld [vmem:[%s9] sm:$0x1]
    %v1064 = vlaneseq
    %v1065 = vshrl.u32 %v1064, 7
    %v1066 = vsub.s32 0, %v1065
    %v1067 = vrot.slane %v1062, %v1066
    %v1101 = vunpack.c.l.b16 %v1030
    %v1102 = vunpack.c.l.b16 %v1031
    %v1103 = vunpack.c.l.b16 %v1032
    %v1104 = vunpack.c.l.b16 %v1033
    %v1105 = vunpack.c.l.b16 %v1034
    %v1106 = vunpack.c.l.b16 %v1035
    %v1107 = vunpack.c.l.b16 %v1036
    %v1108 = vunpack.c.l.b16 %v1037
    %v1109 = vunpack.c.l.b16 %v1038
    %v1110 = vunpack.c.l.b16 %v1039
    %v1111 = vunpack.c.l.b16 %v1040
    %v1112 = vunpack.c.l.b16 %v1041
    %v1113 = vunpack.c.l.b16 %v1042
    %v1114 = vunpack.c.l.b16 %v1043
    %v1115 = vunpack.c.l.b16 %v1044
    %v1116 = vunpack.c.l.b16 %v1045
    %v1117 = vunpack.c.l.b16 %v1046
    %v1118 = vunpack.c.l.b16 %v1047
    %v1119 = vunpack.c.l.b16 %v1048
    %v1120 = vunpack.c.l.b16 %v1049
    %v1121 = vunpack.c.l.b16 %v1050
    %v1122 = vunpack.c.l.b16 %v1051
    %v1123 = vunpack.c.l.b16 %v1052
    %v1124 = vunpack.c.l.b16 %v1053
    %v1125 = vunpack.c.l.b16 %v1054
    %v1126 = vunpack.c.l.b16 %v1055
    %v1127 = vunpack.c.l.b16 %v1056
    %v1128 = vunpack.c.l.b16 %v1057
    %v1129 = vunpack.c.l.b16 %v1058
    %v1130 = vunpack.c.l.b16 %v1059
    %v1131 = vunpack.c.l.b16 %v1060
    %v1132 = vunpack.c.l.b16 %v1061
    %v1133 = vpack.c.b16 %v1102, %v1101
    %v1134 = vpack.c.b16 %v1104, %v1103
    %v1135 = vpack.c.b16 %v1106, %v1105
    %v1136 = vpack.c.b16 %v1108, %v1107
    %v1137 = vpack.c.b16 %v1110, %v1109
    %v1138 = vpack.c.b16 %v1112, %v1111
    %v1139 = vpack.c.b16 %v1114, %v1113
    %v1140 = vpack.c.b16 %v1116, %v1115
    %v1141 = vpack.c.b16 %v1118, %v1117
    %v1142 = vpack.c.b16 %v1120, %v1119
    %v1143 = vpack.c.b16 %v1122, %v1121
    %v1144 = vpack.c.b16 %v1124, %v1123
    %v1145 = vpack.c.b16 %v1126, %v1125
    %v1146 = vpack.c.b16 %v1128, %v1127
    %v1147 = vpack.c.b16 %v1130, %v1129
    %v1148 = vpack.c.b16 %v1132, %v1131
    %1165 = vmatprep.subr.bf16.mxu0 0
    %1166 = vmatpush1.bf16.msra.mxu0 %v1140
    %1167 = vmatprep.subr.bf16.mxu0 0
    %1168 = vmatpush1.bf16.msra.mxu0 %v1139
    %1169 = vmatprep.subr.bf16.mxu0 0
    %1170 = vmatpush1.bf16.msra.mxu0 %v1138
    %1171 = vmatprep.subr.bf16.mxu0 0
    %1172 = vmatpush1.bf16.msra.mxu0 %v1137
    %1173 = vmatprep.subr.bf16.mxu0 0
    %1174 = vmatpush1.bf16.msra.mxu0 %v1136
    %1175 = vmatprep.subr.bf16.mxu0 0
    %1176 = vmatpush1.bf16.msra.mxu0 %v1135
    %1177 = vmatprep.subr.bf16.mxu0 0
    %1178 = vmatpush1.bf16.msra.mxu0 %v1134
    %1179 = vmatprep.subr.bf16.mxu0 0
    %1180 = vmatpush1.bf16.msra.mxu0 %v1133
    %1181 = vmatprep.subr.bf16.mxu0 0
    %1182 = vmatpush2.bf16.msra.mxu0 %v1148
    %1183 = vmatprep.subr.bf16.mxu0 0
    %1184 = vmatpush2.bf16.msra.mxu0 %v1147
    %1185 = vmatprep.subr.bf16.mxu0 0
    %1186 = vmatpush2.bf16.msra.mxu0 %v1146
    %1187 = vmatprep.subr.bf16.mxu0 0
    %1188 = vmatpush2.bf16.msra.mxu0 %v1145
    %1189 = vmatprep.subr.bf16.mxu0 0
    %1190 = vmatpush2.bf16.msra.mxu0 %v1144
    %1191 = vmatprep.subr.bf16.mxu0 0
    %1192 = vmatpush2.bf16.msra.mxu0 %v1143
    %1193 = vmatprep.subr.bf16.mxu0 0
    %1194 = vmatpush2.bf16.msra.mxu0 %v1142
    %1195 = vmatprep.subr.bf16.mxu0 0
    %1196 = vmatpush2.bf16.msra.mxu0 %v1141
    %1197 = vmatprep.mubr.bf16.mxu0 %v1029
    %1198 = vmatmul.mubr.bf16.gmra.mxu0 %v1028
    %v1199 = vpop.f32.mrf.mxu0
    %v1200 = vadd.f32 %v1067, %v1199
    %v1201 = vpop.f32.mrf.mxu0
    %v1202 = vpop.f32.mrf.mxu0
    %v1203 = vadd.f32 %v1067, %v1202
    %v1204 = vpop.f32.mrf.mxu0
    %1205 = vdwg.mxu0
    %v1206 = vadd.f32 %v838, %v1200
    %v1207 = vadd.f32 %v839, %v1203
    %1208 = vadd.xlane.f32.xlu0 %v1206
    %v1209 = vpop.xlane.xlu0 %1208
    %1210 = vadd.xlane.f32.xlu0 %v1207
    %v1211 = vpop.xlane.xlu0 %1210
    %v1212 = vmul.f32 %v1209, %v821
    %v1213 = vmul.f32 %v1211, %v821
    %v1214 = vsub.f32 %v1206, %v1212
    %v1215 = vsub.f32 %v1207, %v1213
    %v1216 = vmul.f32 %v1214, %v1214
    %v1217 = vmul.f32 %v1215, %v1215
    %1218 = vadd.xlane.f32.xlu0 %v1216
    %v1219 = vpop.xlane.xlu0 %1218
    %1220 = vadd.xlane.f32.xlu0 %v1217
    %v1221 = vpop.xlane.xlu0 %1220
    %v1222 = vmul.f32 %v1219, %v821
    %v1223 = vmul.f32 %v1221, %v821
    %v1224 = vadd.f32 %v1222, 1e-05
    %v1225 = vadd.f32 %v1223, 1e-05
    %v1226 = vrsqrt.pop %v1224
    %v1227 = vrsqrt.pop %v1225
    %v1228 = vmul.f32 %v1214, %v1226
    %v1229 = vmul.f32 %v1215, %v1227
    %v1230 = vpack.c.bf16 %v1228, %v1228
    %v1231 = vpack.c.bf16 %v1229, %v1229
    %v1232 = vld [vmem:[#allocation16] sm:$0xf]
    %v1233 = vld [vmem:[#allocation16 + $0x4] sm:$0xf]
    %v1234 = vld [vmem:[#allocation16 + $0x8] sm:$0xf]
    %v1235 = vld [vmem:[#allocation16 + $0xc] sm:$0xf]
    %v1236 = vld [vmem:[#allocation16 + $0x10] sm:$0xf]
    %v1237 = vld [vmem:[#allocation16 + $0x14] sm:$0xf]
    %v1238 = vld [vmem:[#allocation16 + $0x18] sm:$0xf]
    %v1239 = vld [vmem:[#allocation16 + $0x1c] sm:$0xf]
    %v1240 = vld [vmem:[#allocation16 + $0x20] sm:$0xf]
    %v1241 = vld [vmem:[#allocation16 + $0x24] sm:$0xf]
    %v1242 = vld [vmem:[#allocation16 + $0x28] sm:$0xf]
    %v1243 = vld [vmem:[#allocation16 + $0x2c] sm:$0xf]
    %v1244 = vld [vmem:[#allocation16 + $0x30] sm:$0xf]
    %v1245 = vld [vmem:[#allocation16 + $0x34] sm:$0xf]
    %v1246 = vld [vmem:[#allocation16 + $0x38] sm:$0xf]
    %v1247 = vld [vmem:[#allocation16 + $0x3c] sm:$0xf]
    %v1248 = vld [vmem:[%s11] sm:$0x1]
    %v1250 = vlaneseq
    %v1251 = vshrl.u32 %v1250, 7
    %v1252 = vsub.s32 0, %v1251
    %v1253 = vrot.slane %v1248, %v1252
    %v1257 = vunpack.c.l.b16 %v1230
    %v1258 = vunpack.c.l.b16 %v1231
    %v1259 = vrot.slane %v1258, 7
    %vm1260 = vcmask 1041409
    %v1261 = vsel %vm1260, %v1259, %v1257
    %v1262 = vpack.c.b16 %v1261, %v1261
    %v1280 = vunpack.c.l.b16 %v1232
    %v1281 = vunpack.c.l.b16 %v1233
    %v1282 = vunpack.c.l.b16 %v1234
    %v1283 = vunpack.c.l.b16 %v1235
    %v1284 = vunpack.c.l.b16 %v1236
    %v1285 = vunpack.c.l.b16 %v1237
    %v1286 = vunpack.c.l.b16 %v1238
    %v1287 = vunpack.c.l.b16 %v1239
    %v1288 = vunpack.c.l.b16 %v1240
    %v1289 = vunpack.c.l.b16 %v1241
    %v1290 = vunpack.c.l.b16 %v1242
    %v1291 = vunpack.c.l.b16 %v1243
    %v1292 = vunpack.c.l.b16 %v1244
    %v1293 = vunpack.c.l.b16 %v1245
    %v1294 = vunpack.c.l.b16 %v1246
    %v1295 = vunpack.c.l.b16 %v1247
    %v1296 = vpack.c.b16 %v1281, %v1280
    %v1297 = vpack.c.b16 %v1283, %v1282
    %v1298 = vpack.c.b16 %v1285, %v1284
    %v1299 = vpack.c.b16 %v1287, %v1286
    %v1300 = vpack.c.b16 %v1289, %v1288
    %v1301 = vpack.c.b16 %v1291, %v1290
    %v1302 = vpack.c.b16 %v1293, %v1292
    %v1303 = vpack.c.b16 %v1295, %v1294
    %1312 = vmatprep.subr.bf16.mxu0 0
    %1313 = vmatpush1.bf16.msra.mxu0 %v1303
    %1314 = vmatprep.subr.bf16.mxu0 0
    %1315 = vmatpush1.bf16.msra.mxu0 %v1302
    %1316 = vmatprep.subr.bf16.mxu0 0
    %1317 = vmatpush1.bf16.msra.mxu0 %v1301
    %1318 = vmatprep.subr.bf16.mxu0 0
    %1319 = vmatpush1.bf16.msra.mxu0 %v1300
    %1320 = vmatprep.subr.bf16.mxu0 0
    %1321 = vmatpush1.bf16.msra.mxu0 %v1299
    %1322 = vmatprep.subr.bf16.mxu0 0
    %1323 = vmatpush1.bf16.msra.mxu0 %v1298
    %1324 = vmatprep.subr.bf16.mxu0 0
    %1325 = vmatpush1.bf16.msra.mxu0 %v1297
    %1326 = vmatprep.subr.bf16.mxu0 0
    %1327 = vmatpush1.bf16.msra.mxu0 %v1296
    %1328 = vmatprep.subr.bf16.mxu0 0
    %1329 = vmatpush2.bf16.msra.mxu0 0
    %1330 = vmatprep.subr.bf16.mxu0 0
    %1331 = vmatpush2.bf16.msra.mxu0 0
    %1332 = vmatprep.subr.bf16.mxu0 0
    %1333 = vmatpush2.bf16.msra.mxu0 0
    %1334 = vmatprep.subr.bf16.mxu0 0
    %1335 = vmatpush2.bf16.msra.mxu0 0
    %1336 = vmatprep.subr.bf16.mxu0 0
    %1337 = vmatpush2.bf16.msra.mxu0 0
    %1338 = vmatprep.subr.bf16.mxu0 0
    %1339 = vmatpush2.bf16.msra.mxu0 0
    %1340 = vmatprep.subr.bf16.mxu0 0
    %1341 = vmatpush2.bf16.msra.mxu0 0
    %1342 = vmatprep.subr.bf16.mxu0 0
    %1343 = vmatpush2.bf16.msra.mxu0 0
    %1344 = vmatprep.mubr.bf16.mxu0 0
    %1345 = vmatmul.mubr.bf16.gmra.mxu0 %v1262
    %v1346 = vpop.f32.mrf.mxu0
    %v1347 = vadd.f32 %v1253, %v1346
    %v1348 = vpop.f32.mrf.mxu0
    %v1349 = vpop.f32.mrf.mxu0
    %v1350 = vpop.f32.mrf.mxu0
    %1351 = vdwg.mxu0
    %1352 = vst [vmem:[#allocation17] sm:$0x3] %v1347
    // Predicated region
    $region86: #{tpu_custom_call.1} parent=1 // pred_check
      _
    $region87: #{tpu_custom_call.1} parent=1 // pred_check_branch
      %1354 = sbr.rel (0) target = $region89
    $region88: #{tpu_custom_call.1} parent=1 // pred_region
      %s1356 = ssub.s32 32, 32
      %1357 = vsyncadd [#allocation4], %s1356
      %s1359 = sshll.u32 [#allocation17], 4
      %s1360 = int_to_ptr.vmem [resolvable:$true] %s1359
      %1362 = dma.vmem_to_hbm [thread:$0]  %s1360, 32, %s12, [#allocation4]
    $region89: #{tpu_custom_call.1} parent=1 // pred_fallthru
      _
    // Predicated region
    $region90: #{tpu_custom_call.1} parent=1 // pred_check
      _
    $region91: #{tpu_custom_call.1} parent=1 // pred_check_branch
      %1364 = sbr.rel (0) target = $region93
    $region92: #{tpu_custom_call.1} parent=1 // pred_region
      %1365 = dma.done [#allocation4], 32
    $region93: #{tpu_custom_call.1} parent=1 // pred_fallthru
      _
    %1366 = vsyncpa [#allocation3], 1
    %1367 = vsyncpa [#allocation6], 1
    %1368 = vsyncpa [#allocation9], 1
    %1369 = vsyncpa [#allocation12], 1
    %1370 = vsyncpa [#allocation15], 1
    %1371 = vsyncpa [#allocation4], 1

</llo_original>
